<compile_context>
chip_gen: v6e
topology: v6e:2x2x1
jax: 0.10.0
libtpu: 0.0.40
codegen_flags: <defaults>
</compile_context>

<pallas_src>
import jax
import jax.numpy as jnp
from jax import lax
from jax.experimental import pallas as pl
from jax.experimental.pallas import tpu as pltpu

LATENT_DIM = 40
IN_DIM = 28 * 28            # 784 — used as-is (no lane pad)
H1 = 512
H2 = 256
HEAD_PAD = 128              # fused mu/logvar head padded to one lane width

# Packed output-slab lane layout.
Z_OFF = 0
LV_OFF = LATENT_DIM         # 40
MU_OFF = 2 * LATENT_DIM     # 80


def _round_up(x, m):
    return (x + m - 1) // m * m


def _pick_tb(B):
    """Batch tile: big + 256-multiple for v6e/v7x MXU rows, >=2 grid steps
    when B allows (v7x megacore), and >=16 rows for bf16 sublane packing."""
    if B >= 1024:
        return 512
    if B >= 512:
        return 256
    if B >= 128:
        return 128
    return _round_up(max(B, 1), 16)


def vae_forward_kernel(x_ref, w1_ref, b1_ref, w2_ref, b2_ref, wh_ref, bh_ref,
                       eps_ref, out_ref):
    # Encoder: Linear(784 -> 512) + ReLU.  bf16 operands, f32 MXU accumulate.
    h1 = jnp.dot(x_ref[...], w1_ref[...],
                 preferred_element_type=jnp.float32) + b1_ref[...]
    h1 = jnp.maximum(h1, 0.0).astype(jnp.bfloat16)

    # Encoder: Linear(512 -> 256) + ReLU.
    h2 = jnp.dot(h1, w2_ref[...],
                 preferred_element_type=jnp.float32) + b2_ref[...]
    h2 = jnp.maximum(h2, 0.0).astype(jnp.bfloat16)

    # Fused heads: one lane-dense (256, 128) matmul instead of two (256, 40).
    # head lanes: [0:40]=mu, [40:80]=logvar, [80:120]=mu (dup), [120:128]=0.
    head = jnp.dot(h2, wh_ref[...],
                   preferred_element_type=jnp.float32) + bh_ref[...]

    # Reparameterize into lanes [0:40]:  z = mu + eps * exp(0.5 * logvar).
    # pltpu.roll by +88 (== -40 mod 128): single XLU lane rotation aligning
    # the logvar lanes [40:80] with lanes [0:40].
    std_at_z = jnp.exp(0.5 * pltpu.roll(head, HEAD_PAD - LATENT_DIM, axis=1))
    lane = lax.broadcasted_iota(jnp.int32, head.shape, 1)
    # Keep the mask: it blocks a potential 0*inf -> NaN from exp() over the
    # rolled mu-dup lanes; the select is a couple of VPU ops per tile.
    z_term = jnp.where(lane < LATENT_DIM,
                       eps_ref[...].astype(jnp.float32) * std_at_z, 0.0)

    # Packed slab: [z | logvar | mu | pad] — one unmasked (tb, 128) f32 store.
    out_ref[...] = head + z_term


def vae_forward(x_nchw, params, eps):
    """x_nchw: (B, 1, 28, 28) f32; eps: (B, 40) f32.  Returns (z, mu, logvar)."""
    B = x_nchw.shape[0]
    w1, b1, w2, b2, wmu, bmu, wlv, blv = params

    # ---- host-side layout plumbing only (no math moved out of the kernel) ----
    x_flat = x_nchw.reshape(B, -1).astype(jnp.float32)     # nn.Flatten
    tb = _pick_tb(B)
    b_pad = _round_up(B, tb)
    nb = b_pad // tb

    # Streamed per-row operands: x bf16 at natural K=784, eps bf16 at lanes
    # [0:40] of the 128-wide slab (zero elsewhere).
    x_p = jnp.pad(x_flat, ((0, b_pad - B), (0, 0))).astype(jnp.bfloat16)
    eps_p = jnp.pad(eps.astype(jnp.bfloat16),
                    ((0, b_pad - B), (0, HEAD_PAD - LATENT_DIM)))

    # VMEM-resident weights/biases (constant index_map -> DMA'd once).
    w1_b = w1.astype(jnp.bfloat16)
    w2_b = w2.astype(jnp.bfloat16)
    b1_f = b1.astype(jnp.float32)
    b2_f = b2.astype(jnp.float32)

    # Fused head weight/bias: cols [0:40]=wmu, [40:80]=wlv, [80:120]=wmu, 0 pad.
    pad_tail = HEAD_PAD - 3 * LATENT_DIM
    wh = jnp.concatenate(
        [wmu, wlv, wmu, jnp.zeros((H2, pad_tail), w1.dtype)], axis=1
    ).astype(jnp.bfloat16)
    bh = jnp.concatenate(
        [bmu, blv, bmu, jnp.zeros((1, pad_tail), w1.dtype)], axis=1
    ).astype(jnp.float32)

    batch_spec = lambda n: pl.BlockSpec((tb, n), lambda i: (i, 0))
    resident = lambda shape: pl.BlockSpec(shape, lambda i: (0, 0))  # stays in VMEM

    flops = 2 * b_pad * (IN_DIM * H1 + H1 * H2 + H2 * HEAD_PAD)
    bytes_accessed = (
        b_pad * (IN_DIM * 2 + HEAD_PAD * 2 + HEAD_PAD * 4)        # x + eps + out
        + IN_DIM * H1 * 2 + H1 * 4                                 # w1 + b1
        + H1 * H2 * 2 + H2 * 4                                     # w2 + b2
        + H2 * HEAD_PAD * 2 + HEAD_PAD * 4)                        # wh + bh

    out = pl.pallas_call(
        vae_forward_kernel,
        out_shape=jax.ShapeDtypeStruct((b_pad, HEAD_PAD), jnp.float32),
        grid=(nb,),
        in_specs=[
            batch_spec(IN_DIM),                       # x tile (tb, 784) bf16
            resident((IN_DIM, H1)), resident((1, H1)),
            resident((H1, H2)), resident((1, H2)),
            resident((H2, HEAD_PAD)), resident((1, HEAD_PAD)),
            batch_spec(HEAD_PAD),                     # eps tile (tb, 128) bf16
        ],
        out_specs=batch_spec(HEAD_PAD),
        compiler_params=pltpu.CompilerParams(
            dimension_semantics=("parallel",)),       # shard batch on v7x TCs
        cost_estimate=pl.CostEstimate(
            flops=flops,
            transcendentals=b_pad * HEAD_PAD,
            bytes_accessed=bytes_accessed),
    )(x_p, w1_b, b1_f, w2_b, b2_f, wh, bh, eps_p)

    z = out[:B, Z_OFF:Z_OFF + LATENT_DIM]
    logvar = out[:B, LV_OFF:LV_OFF + LATENT_DIM]
    mu = out[:B, MU_OFF:MU_OFF + LATENT_DIM]
    return z, mu, logvar


def init_params(key):
    """Deterministic init mimicking PyTorch nn.Linear default (U[-1/sqrt(fan_in), +])."""
    def linear(k, fan_in, fan_out):
        kw, kb = jax.random.split(k)
        bound = 1.0 / jnp.sqrt(fan_in)
        w = jax.random.uniform(kw, (fan_in, fan_out), jnp.float32, -bound, bound)
        b = jax.random.uniform(kb, (1, fan_out), jnp.float32, -bound, bound)
        return w, b

    k1, k2, k3, k4 = jax.random.split(key, 4)
    w1, b1 = linear(k1, IN_DIM, H1)
    w2, b2 = linear(k2, H1, H2)
    wmu, bmu = linear(k3, H2, LATENT_DIM)
    wlv, blv = linear(k4, H2, LATENT_DIM)
    return (w1, b1, w2, b2, wmu, bmu, wlv, blv)


if __name__ == "__main__":
    key = jax.random.PRNGKey(0)
    k_param, k_x, k_eps = jax.random.split(key, 3)

    B = 8
    x = jax.random.normal(k_x, (B, 1, 28, 28), jnp.float32)       # NCHW like PyTorch
    eps = jax.random.normal(k_eps, (B, LATENT_DIM), jnp.float32)  # torch.randn_like(std)
    params = init_params(k_param)

    z, mu, logvar = vae_forward(x, params, eps)
    jax.block_until_ready((z, mu, logvar))

    # Reference check in plain f32 JAX (same math, same params/eps).
    # bf16 matmul operands + bf16-streamed eps in the kernel -> loose tolerances.
    w1, b1, w2, b2, wmu, bmu, wlv, blv = params
    xf = x.reshape(B, -1)
    h1 = jnp.maximum(xf @ w1 + b1, 0.0)
    h2 = jnp.maximum(h1 @ w2 + b2, 0.0)
    mu_ref = h2 @ wmu + bmu
    lv_ref = h2 @ wlv + blv
    z_ref = mu_ref + eps * jnp.exp(0.5 * lv_ref)

    assert z.shape == (B, LATENT_DIM)
    assert mu.shape == (B, LATENT_DIM) and logvar.shape == (B, LATENT_DIM)
    assert jnp.allclose(mu, mu_ref, atol=3e-2, rtol=3e-2)
    assert jnp.allclose(logvar, lv_ref, atol=3e-2, rtol=3e-2)
    assert jnp.allclose(z, z_ref, atol=4e-2, rtol=3e-2)

    print("KERNEL_OK")
</pallas_src>

<mosaic_0001>
module attributes {stable_mosaic.version = 11 : i64} {
  func.func @vae_forward_kernel(%arg0: i32, %arg1: memref<16x784xbf16, #tpu.memory_space<vmem>>, %arg2: memref<784x512xbf16, #tpu.memory_space<vmem>>, %arg3: memref<1x512xf32, #tpu.memory_space<vmem>>, %arg4: memref<512x256xbf16, #tpu.memory_space<vmem>>, %arg5: memref<1x256xf32, #tpu.memory_space<vmem>>, %arg6: memref<256x128xbf16, #tpu.memory_space<vmem>>, %arg7: memref<1x128xf32, #tpu.memory_space<vmem>>, %arg8: memref<16x128xbf16, #tpu.memory_space<vmem>>, %arg9: memref<16x128xf32, #tpu.memory_space<vmem>>) attributes {dimension_semantics = [#tpu.dimension_semantics<parallel>], iteration_bounds = array<i64: 1>, scalar_prefetch = 0 : i64, scratch_operands = 0 : i64, tpu.core_type = #tpu.core_type<tc>, window_params = [{transform_indices = @transform_0, window_bounds = array<i64: 16, 784>}, {pipeline_mode = #tpu.pipeline_mode<synchronous>, transform_indices = @transform_1, window_bounds = array<i64: 784, 512>}, {pipeline_mode = #tpu.pipeline_mode<synchronous>, transform_indices = @transform_2, window_bounds = array<i64: 1, 512>}, {pipeline_mode = #tpu.pipeline_mode<synchronous>, transform_indices = @transform_3, window_bounds = array<i64: 512, 256>}, {pipeline_mode = #tpu.pipeline_mode<synchronous>, transform_indices = @transform_4, window_bounds = array<i64: 1, 256>}, {pipeline_mode = #tpu.pipeline_mode<synchronous>, transform_indices = @transform_5, window_bounds = array<i64: 256, 128>}, {pipeline_mode = #tpu.pipeline_mode<synchronous>, transform_indices = @transform_6, window_bounds = array<i64: 1, 128>}, {transform_indices = @transform_7, window_bounds = array<i64: 16, 128>}, {transform_indices = @transform_8, window_bounds = array<i64: 16, 128>}]} {
    %c0 = arith.constant 0 : index
    %c0_0 = arith.constant 0 : index
    %0 = vector.load %arg1[%c0, %c0_0] : memref<16x784xbf16, #tpu.memory_space<vmem>>, vector<16x784xbf16>
    %c0_1 = arith.constant 0 : index
    %c0_2 = arith.constant 0 : index
    %1 = vector.load %arg2[%c0_1, %c0_2] : memref<784x512xbf16, #tpu.memory_space<vmem>>, vector<784x512xbf16>
    %cst = arith.constant dense<0.000000e+00> : vector<16x512xf32>
    %2 = tpu.matmul %0, %1, %cst {dimension_numbers = #tpu.dot_dimension_numbers<[1], [0], [0], [1], [0, 0, 1, 1], [], []>} : vector<16x784xbf16>, vector<784x512xbf16>, vector<16x512xf32> -> vector<16x512xf32>
    %c0_3 = arith.constant 0 : index
    %c0_4 = arith.constant 0 : index
    %3 = vector.load %arg3[%c0_3, %c0_4] : memref<1x512xf32, #tpu.memory_space<vmem>>, vector<1x512xf32>
    %4 = vector.broadcast %3 : vector<1x512xf32> to vector<16x512xf32>
    %5 = arith.addf %2, %4 : vector<16x512xf32>
    %cst_5 = arith.constant 0.000000e+00 : f32
    %6 = vector.broadcast %cst_5 : f32 to vector<16x512xf32>
    %7 = arith.maximumf %5, %6 : vector<16x512xf32>
    %8 = arith.truncf %7 : vector<16x512xf32> to vector<16x512xbf16>
    %c0_6 = arith.constant 0 : index
    %c0_7 = arith.constant 0 : index
    %9 = vector.load %arg4[%c0_6, %c0_7] : memref<512x256xbf16, #tpu.memory_space<vmem>>, vector<512x256xbf16>
    %cst_8 = arith.constant dense<0.000000e+00> : vector<16x256xf32>
    %10 = tpu.matmul %8, %9, %cst_8 {dimension_numbers = #tpu.dot_dimension_numbers<[1], [0], [0], [1], [0, 0, 1, 1], [], []>} : vector<16x512xbf16>, vector<512x256xbf16>, vector<16x256xf32> -> vector<16x256xf32>
    %c0_9 = arith.constant 0 : index
    %c0_10 = arith.constant 0 : index
    %11 = vector.load %arg5[%c0_9, %c0_10] : memref<1x256xf32, #tpu.memory_space<vmem>>, vector<1x256xf32>
    %12 = vector.broadcast %11 : vector<1x256xf32> to vector<16x256xf32>
    %13 = arith.addf %10, %12 : vector<16x256xf32>
    %cst_11 = arith.constant 0.000000e+00 : f32
    %14 = vector.broadcast %cst_11 : f32 to vector<16x256xf32>
    %15 = arith.maximumf %13, %14 : vector<16x256xf32>
    %16 = arith.truncf %15 : vector<16x256xf32> to vector<16x256xbf16>
    %c0_12 = arith.constant 0 : index
    %c0_13 = arith.constant 0 : index
    %17 = vector.load %arg6[%c0_12, %c0_13] : memref<256x128xbf16, #tpu.memory_space<vmem>>, vector<256x128xbf16>
    %cst_14 = arith.constant dense<0.000000e+00> : vector<16x128xf32>
    %18 = tpu.matmul %16, %17, %cst_14 {dimension_numbers = #tpu.dot_dimension_numbers<[1], [0], [0], [1], [0, 0, 1, 1], [], []>} : vector<16x256xbf16>, vector<256x128xbf16>, vector<16x128xf32> -> vector<16x128xf32>
    %c0_15 = arith.constant 0 : index
    %c0_16 = arith.constant 0 : index
    %19 = vector.load %arg7[%c0_15, %c0_16] : memref<1x128xf32, #tpu.memory_space<vmem>>, vector<1x128xf32>
    %20 = vector.broadcast %19 : vector<1x128xf32> to vector<16x128xf32>
    %21 = arith.addf %18, %20 : vector<16x128xf32>
    %c88_i32 = arith.constant 88 : i32
    %22 = tpu.dynamic_rotate %21 by %c88_i32 dim 1 : vector<16x128xf32>, i32 -> vector<16x128xf32>
    %cst_17 = arith.constant 5.000000e-01 : f32
    %23 = vector.broadcast %cst_17 : f32 to vector<16x128xf32>
    %24 = arith.mulf %23, %22 : vector<16x128xf32>
    %25 = math.exp %24 : vector<16x128xf32>
    %26 = tpu.iota {dimensions = array<i32: 1>} : vector<16x128xi32>
    %c40_i32 = arith.constant 40 : i32
    %27 = vector.broadcast %c40_i32 : i32 to vector<16x128xi32>
    %28 = arith.cmpi slt, %26, %27 : vector<16x128xi32>
    %c0_18 = arith.constant 0 : index
    %c0_19 = arith.constant 0 : index
    %29 = vector.load %arg8[%c0_18, %c0_19] : memref<16x128xbf16, #tpu.memory_space<vmem>>, vector<16x128xbf16>
    %30 = arith.extf %29 : vector<16x128xbf16> to vector<16x128xf32>
    %31 = arith.mulf %30, %25 : vector<16x128xf32>
    %cst_20 = arith.constant 0.000000e+00 : f32
    %32 = vector.broadcast %cst_20 : f32 to vector<16x128xf32>
    %33 = arith.select %28, %31, %32 : vector<16x128xi1>, vector<16x128xf32>
    %34 = arith.addf %21, %33 : vector<16x128xf32>
    %c0_21 = arith.constant 0 : index
    %c0_22 = arith.constant 0 : index
    %35 = vector.load %arg9[%c0_21, %c0_22] : memref<16x128xf32, #tpu.memory_space<vmem>>, vector<16x128xf32>
    tpu.vector_store %arg9[%c0_21, %c0_22], %34 {strides = array<i32>} : memref<16x128xf32, #tpu.memory_space<vmem>>, vector<16x128xf32>,
    return
  }
  func.func @transform_0(%arg0: i32) -> (i32, i32) {
    %c0_i32 = arith.constant 0 : i32
    %c0_i32_0 = arith.constant 0 : i32
    return %arg0, %c0_i32 : i32, i32
  }
  func.func @transform_1(%arg0: i32) -> (i32, i32) {
    %c0_i32 = arith.constant 0 : i32
    %c0_i32_0 = arith.constant 0 : i32
    %c0_i32_1 = arith.constant 0 : i32
    return %c0_i32, %c0_i32_0 : i32, i32
  }
  func.func @transform_2(%arg0: i32) -> (i32, i32) {
    %c0_i32 = arith.constant 0 : i32
    %c0_i32_0 = arith.constant 0 : i32
    %c0_i32_1 = arith.constant 0 : i32
    return %c0_i32, %c0_i32_0 : i32, i32
  }
  func.func @transform_3(%arg0: i32) -> (i32, i32) {
    %c0_i32 = arith.constant 0 : i32
    %c0_i32_0 = arith.constant 0 : i32
    %c0_i32_1 = arith.constant 0 : i32
    return %c0_i32, %c0_i32_0 : i32, i32
  }
  func.func @transform_4(%arg0: i32) -> (i32, i32) {
    %c0_i32 = arith.constant 0 : i32
    %c0_i32_0 = arith.constant 0 : i32
    %c0_i32_1 = arith.constant 0 : i32
    return %c0_i32, %c0_i32_0 : i32, i32
  }
  func.func @transform_5(%arg0: i32) -> (i32, i32) {
    %c0_i32 = arith.constant 0 : i32
    %c0_i32_0 = arith.constant 0 : i32
    %c0_i32_1 = arith.constant 0 : i32
    return %c0_i32, %c0_i32_0 : i32, i32
  }
  func.func @transform_6(%arg0: i32) -> (i32, i32) {
    %c0_i32 = arith.constant 0 : i32
    %c0_i32_0 = arith.constant 0 : i32
    %c0_i32_1 = arith.constant 0 : i32
    return %c0_i32, %c0_i32_0 : i32, i32
  }
  func.func @transform_7(%arg0: i32) -> (i32, i32) {
    %c0_i32 = arith.constant 0 : i32
    %c0_i32_0 = arith.constant 0 : i32
    return %arg0, %c0_i32 : i32, i32
  }
  func.func @transform_8(%arg0: i32) -> (i32, i32) {
    %c0_i32 = arith.constant 0 : i32
    %c0_i32_0 = arith.constant 0 : i32
    return %arg0, %c0_i32 : i32, i32
  }
}

</mosaic_0001>

<llo_original>
// kernel: tpu_custom_call.1
$region0: #{tpu_custom_call.1}
  #allocation0 [shape = 'u32[]', space=smem, size = 0x4, offset = 0x4, fixed_abs, tag = 'smem constant byte address 0x4 - core index']
  #allocation1 [shape = 'u32[144,128]{1,0:T(1,128)}', space=vmem, size = 0x12000, scoped, tag = 'internal scratch']
  %s0 = inlined_call_operand.hbm [shape: bf16[16,784], index: 0, kind: input, shape index: {}]
  %s1 = inlined_call_operand.hbm [shape: bf16[784,512], index: 1, kind: input, shape index: {}]
  %s2 = inlined_call_operand.hbm [shape: f32[1,512], index: 2, kind: input, shape index: {}]
  %s3 = inlined_call_operand.hbm [shape: bf16[512,256], index: 3, kind: input, shape index: {}]
  %s4 = inlined_call_operand.vmem [shape: f32[1,256], index: 4, kind: input, shape index: {}]
  %s5 = inlined_call_operand.hbm [shape: bf16[256,128], index: 5, kind: input, shape index: {}]
  %s6 = inlined_call_operand.vmem [shape: f32[1,128], index: 6, kind: input, shape index: {}]
  %s7 = inlined_call_operand.vmem [shape: bf16[16,128], index: 7, kind: input, shape index: {}]
  %s8 = inlined_call_operand.hbm [shape: f32[16,128], index: 8, kind: output, shape index: {}]
  %s9 = sld [smem:[#allocation0]]
  $region62: #{tpu_custom_call.1} parent=0
    _
  %s11 = ssub.s32 1, %s9
  %s12 = scalar_select 0, %s11, %s9
  $region1: #{tpu_custom_call.1} parent=0
    #allocation2 [shape = 'u8[28672]{0}', space=vmem, size = 0x7000, scoped, tag = 'input window, operand 0, single buffered']
    #allocation3 [shape = 's32[1]{0}', space=sflag, size = 0x4, scoped, tag = 'scoped memory for tpu_custom_call.1']
    #allocation4 [shape = 's32[1]{0}', space=sflag, size = 0x4, scoped, tag = 'scoped memory for tpu_custom_call.1']
    #allocation5 [shape = 'u8[802816]{0}', space=vmem, size = 0xc4000, scoped, tag = 'input window, operand 1, single buffered']
    #allocation6 [shape = 's32[1]{0}', space=sflag, size = 0x4, scoped, tag = 'scoped memory for tpu_custom_call.1']
    #allocation7 [shape = 'u8[2048]{0}', space=vmem, size = 0x800, scoped, tag = 'input window, operand 2, single buffered']
    #allocation8 [shape = 'u8[262144]{0}', space=vmem, size = 0x40000, scoped, tag = 'input window, operand 3, single buffered']
    #allocation9 [shape = 's32[1]{0}', space=sflag, size = 0x4, scoped, tag = 'scoped memory for tpu_custom_call.1']
    #allocation10 [shape = 'u8[65536]{0}', space=vmem, size = 0x10000, scoped, tag = 'input window, operand 5, single buffered']
    #allocation11 [shape = 'u8[8192]{0}', space=vmem, size = 0x2000, scoped, tag = 'output window, operand 0, single buffered']
    %13 = vsyncpa [#allocation3], 0
    %14 = vsyncpa [#allocation6], 0
    %15 = vsyncpa [#allocation9], 0
    %16 = vsyncpa [#allocation4], 0
    // Predicated region
    $region2: #{tpu_custom_call.1} parent=1 // pred_check
      _
    $region3: #{tpu_custom_call.1} parent=1 // pred_check_branch
      %18 = sbr.rel (0) target = $region5
    $region4: #{tpu_custom_call.1} parent=1 // pred_region
      %s20 = ssub.s32 896, 896
      %21 = vsyncadd [#allocation3], %s20
      %s22 = sshll.u32 [#allocation2], 4
      %s23 = int_to_ptr.vmem [resolvable:$true] %s22
      %28 = dma.hbm_to_vmem [thread:$0]  %s0, 896, %s23, [#allocation3], 448, 448, 28
    $region5: #{tpu_custom_call.1} parent=1 // pred_fallthru
      _
    // Predicated region
    $region6: #{tpu_custom_call.1} parent=1 // pred_check
      _
    $region7: #{tpu_custom_call.1} parent=1 // pred_check_branch
      %30 = sbr.rel (0) target = $region9
    $region8: #{tpu_custom_call.1} parent=1 // pred_region
      %s32 = ssub.s32 25088, 25088
      %33 = vsyncadd [#allocation6], %s32
      %s34 = sshll.u32 [#allocation5], 4
      %s35 = int_to_ptr.vmem [resolvable:$true] %s34
      %40 = dma.hbm_to_vmem [thread:$0]  %s1, 25088, %s35, [#allocation6], 256, 256, 16
    $region9: #{tpu_custom_call.1} parent=1 // pred_fallthru
      _
    // Predicated region
    $region10: #{tpu_custom_call.1} parent=1 // pred_check
      _
    $region11: #{tpu_custom_call.1} parent=1 // pred_check_branch
      %42 = sbr.rel (0) target = $region13
    $region12: #{tpu_custom_call.1} parent=1 // pred_region
      %s44 = ssub.s32 64, 64
      %45 = vsyncadd [#allocation6], %s44
      %s47 = sshll.u32 [#allocation7], 4
      %s48 = int_to_ptr.vmem [resolvable:$true] %s47
      %50 = dma.hbm_to_vmem [thread:$0]  %s2, 64, %s48, [#allocation6]
    $region13: #{tpu_custom_call.1} parent=1 // pred_fallthru
      _
    // Predicated region
    $region14: #{tpu_custom_call.1} parent=1 // pred_check
      _
    $region15: #{tpu_custom_call.1} parent=1 // pred_check_branch
      %52 = sbr.rel (0) target = $region17
    $region16: #{tpu_custom_call.1} parent=1 // pred_region
      %s54 = ssub.s32 8192, 8192
      %55 = vsyncadd [#allocation9], %s54
      %s56 = sshll.u32 [#allocation8], 4
      %s57 = int_to_ptr.vmem [resolvable:$true] %s56
      %62 = dma.hbm_to_vmem [thread:$0]  %s3, 8192, %s57, [#allocation9], 128, 128, 8
    $region17: #{tpu_custom_call.1} parent=1 // pred_fallthru
      _
    // Predicated region
    $region18: #{tpu_custom_call.1} parent=1 // pred_check
      _
    $region19: #{tpu_custom_call.1} parent=1 // pred_check_branch
      %64 = sbr.rel (0) target = $region21
    $region20: #{tpu_custom_call.1} parent=1 // pred_region
      _
    $region21: #{tpu_custom_call.1} parent=1 // pred_fallthru
      _
    // Predicated region
    $region22: #{tpu_custom_call.1} parent=1 // pred_check
      _
    $region23: #{tpu_custom_call.1} parent=1 // pred_check_branch
      %66 = sbr.rel (0) target = $region25
    $region24: #{tpu_custom_call.1} parent=1 // pred_region
      %s68 = ssub.s32 2048, 2048
      %69 = vsyncadd [#allocation9], %s68
      %s70 = sshll.u32 [#allocation10], 4
      %s71 = int_to_ptr.vmem [resolvable:$true] %s70
      %76 = dma.hbm_to_vmem [thread:$0]  %s5, 2048, %s71, [#allocation9], 64, 64, 4
    $region25: #{tpu_custom_call.1} parent=1 // pred_fallthru
      _
    // Predicated region
    $region26: #{tpu_custom_call.1} parent=1 // pred_check
      _
    $region27: #{tpu_custom_call.1} parent=1 // pred_check_branch
      %78 = sbr.rel (0) target = $region29
    $region28: #{tpu_custom_call.1} parent=1 // pred_region
      _
    $region29: #{tpu_custom_call.1} parent=1 // pred_fallthru
      _
    // Predicated region
    $region30: #{tpu_custom_call.1} parent=1 // pred_check
      _
    $region31: #{tpu_custom_call.1} parent=1 // pred_check_branch
      %80 = sbr.rel (0) target = $region33
    $region32: #{tpu_custom_call.1} parent=1 // pred_region
      _
    $region33: #{tpu_custom_call.1} parent=1 // pred_fallthru
      _
    // Predicated region
    $region34: #{tpu_custom_call.1} parent=1 // pred_check
      _
    $region35: #{tpu_custom_call.1} parent=1 // pred_check_branch
      %82 = sbr.rel (0) target = $region37
    $region36: #{tpu_custom_call.1} parent=1 // pred_region
      %83 = dma.done [#allocation3], 896
    $region37: #{tpu_custom_call.1} parent=1 // pred_fallthru
      _
    // Predicated region
    $region38: #{tpu_custom_call.1} parent=1 // pred_check
      _
    $region39: #{tpu_custom_call.1} parent=1 // pred_check_branch
      %85 = sbr.rel (0) target = $region41
    $region40: #{tpu_custom_call.1} parent=1 // pred_region
      %86 = dma.done [#allocation6], 25088
    $region41: #{tpu_custom_call.1} parent=1 // pred_fallthru
      _
    // Predicated region
    $region42: #{tpu_custom_call.1} parent=1 // pred_check
      _
    $region43: #{tpu_custom_call.1} parent=1 // pred_check_branch
      %88 = sbr.rel (0) target = $region45
    $region44: #{tpu_custom_call.1} parent=1 // pred_region
      %89 = dma.done [#allocation6], 64
    $region45: #{tpu_custom_call.1} parent=1 // pred_fallthru
      _
    // Predicated region
    $region46: #{tpu_custom_call.1} parent=1 // pred_check
      _
    $region47: #{tpu_custom_call.1} parent=1 // pred_check_branch
      %91 = sbr.rel (0) target = $region49
    $region48: #{tpu_custom_call.1} parent=1 // pred_region
      %92 = dma.done [#allocation9], 8192
    $region49: #{tpu_custom_call.1} parent=1 // pred_fallthru
      _
    // Predicated region
    $region50: #{tpu_custom_call.1} parent=1 // pred_check
      _
    $region51: #{tpu_custom_call.1} parent=1 // pred_check_branch
      %94 = sbr.rel (0) target = $region53
    $region52: #{tpu_custom_call.1} parent=1 // pred_region
      %95 = dma.done [#allocation9], 2048
    $region53: #{tpu_custom_call.1} parent=1 // pred_fallthru
      _
    %v97 = vld [vmem:[#allocation2] sm:$0xff]
    %v98 = vld [vmem:[#allocation2 + $0x8] sm:$0xff]
    %v99 = vld [vmem:[#allocation2 + $0x10] sm:$0xff]
    %v100 = vld [vmem:[#allocation2 + $0x18] sm:$0xf]
    %v101 = vld [vmem:[#allocation2 + $0x1c] sm:$0xff]
    %v102 = vld [vmem:[#allocation2 + $0x24] sm:$0xff]
    %v103 = vld [vmem:[#allocation2 + $0x2c] sm:$0xff]
    %v104 = vld [vmem:[#allocation2 + $0x34] sm:$0xf]
    %v105 = vld [vmem:[#allocation5] sm:$0xff]
    %v106 = vld [vmem:[#allocation5 + $0x8] sm:$0xff]
    %v107 = vld [vmem:[#allocation5 + $0x10] sm:$0xff]
    %v108 = vld [vmem:[#allocation5 + $0x18] sm:$0xff]
    %v109 = vld [vmem:[#allocation5 + $0x20] sm:$0xff]
    %v110 = vld [vmem:[#allocation5 + $0x28] sm:$0xff]
    %v111 = vld [vmem:[#allocation5 + $0x30] sm:$0xff]
    %v112 = vld [vmem:[#allocation5 + $0x38] sm:$0xff]
    %v113 = vld [vmem:[#allocation5 + $0x40] sm:$0xff]
    %v114 = vld [vmem:[#allocation5 + $0x48] sm:$0xff]
    %v115 = vld [vmem:[#allocation5 + $0x50] sm:$0xff]
    %v116 = vld [vmem:[#allocation5 + $0x58] sm:$0xff]
    %v117 = vld [vmem:[#allocation5 + $0x60] sm:$0xff]
    %v118 = vld [vmem:[#allocation5 + $0x68] sm:$0xff]
    %v119 = vld [vmem:[#allocation5 + $0x70] sm:$0xff]
    %v120 = vld [vmem:[#allocation5 + $0x78] sm:$0xff]
    %v121 = vld [vmem:[#allocation5 + $0x80] sm:$0xff]
    %v122 = vld [vmem:[#allocation5 + $0x88] sm:$0xff]
    %v123 = vld [vmem:[#allocation5 + $0x90] sm:$0xff]
    %v124 = vld [vmem:[#allocation5 + $0x98] sm:$0xff]
    %v125 = vld [vmem:[#allocation5 + $0xa0] sm:$0xff]
    %v126 = vld [vmem:[#allocation5 + $0xa8] sm:$0xff]
    %v127 = vld [vmem:[#allocation5 + $0xb0] sm:$0xff]
    %v128 = vld [vmem:[#allocation5 + $0xb8] sm:$0xff]
    %v129 = vld [vmem:[#allocation5 + $0xc0] sm:$0xff]
    %v130 = vld [vmem:[#allocation5 + $0xc8] sm:$0xff]
    %v131 = vld [vmem:[#allocation5 + $0xd0] sm:$0xff]
    %v132 = vld [vmem:[#allocation5 + $0xd8] sm:$0xff]
    %v133 = vld [vmem:[#allocation5 + $0xe0] sm:$0xff]
    %v134 = vld [vmem:[#allocation5 + $0xe8] sm:$0xff]
    %v135 = vld [vmem:[#allocation5 + $0xf0] sm:$0xff]
    %v136 = vld [vmem:[#allocation5 + $0xf8] sm:$0xff]
    %v137 = vld [vmem:[#allocation5 + $0x100] sm:$0xff]
    %v138 = vld [vmem:[#allocation5 + $0x108] sm:$0xff]
    %v139 = vld [vmem:[#allocation5 + $0x110] sm:$0xff]
    %v140 = vld [vmem:[#allocation5 + $0x118] sm:$0xff]
    %v141 = vld [vmem:[#allocation5 + $0x120] sm:$0xff]
    %v142 = vld [vmem:[#allocation5 + $0x128] sm:$0xff]
    %v143 = vld [vmem:[#allocation5 + $0x130] sm:$0xff]
    %v144 = vld [vmem:[#allocation5 + $0x138] sm:$0xff]
    %v145 = vld [vmem:[#allocation5 + $0x140] sm:$0xff]
    %v146 = vld [vmem:[#allocation5 + $0x148] sm:$0xff]
    %v147 = vld [vmem:[#allocation5 + $0x150] sm:$0xff]
    %v148 = vld [vmem:[#allocation5 + $0x158] sm:$0xff]
    %v149 = vld [vmem:[#allocation5 + $0x160] sm:$0xff]
    %v150 = vld [vmem:[#allocation5 + $0x168] sm:$0xff]
    %v151 = vld [vmem:[#allocation5 + $0x170] sm:$0xff]
    %v152 = vld [vmem:[#allocation5 + $0x178] sm:$0xff]
    %v153 = vld [vmem:[#allocation5 + $0x180] sm:$0xff]
    %v154 = vld [vmem:[#allocation5 + $0x188] sm:$0xff]
    %v155 = vld [vmem:[#allocation5 + $0x190] sm:$0xff]
    %v156 = vld [vmem:[#allocation5 + $0x198] sm:$0xff]
    %v157 = vld [vmem:[#allocation5 + $0x1a0] sm:$0xff]
    %v158 = vld [vmem:[#allocation5 + $0x1a8] sm:$0xff]
    %v159 = vld [vmem:[#allocation5 + $0x1b0] sm:$0xff]
    %v160 = vld [vmem:[#allocation5 + $0x1b8] sm:$0xff]
    %v161 = vld [vmem:[#allocation5 + $0x1c0] sm:$0xff]
    %v162 = vld [vmem:[#allocation5 + $0x1c8] sm:$0xff]
    %v163 = vld [vmem:[#allocation5 + $0x1d0] sm:$0xff]
    %v164 = vld [vmem:[#allocation5 + $0x1d8] sm:$0xff]
    %v165 = vld [vmem:[#allocation5 + $0x1e0] sm:$0xff]
    %v166 = vld [vmem:[#allocation5 + $0x1e8] sm:$0xff]
    %v167 = vld [vmem:[#allocation5 + $0x1f0] sm:$0xff]
    %v168 = vld [vmem:[#allocation5 + $0x1f8] sm:$0xff]
    %v169 = vld [vmem:[#allocation5 + $0x200] sm:$0xff]
    %v170 = vld [vmem:[#allocation5 + $0x208] sm:$0xff]
    %v171 = vld [vmem:[#allocation5 + $0x210] sm:$0xff]
    %v172 = vld [vmem:[#allocation5 + $0x218] sm:$0xff]
    %v173 = vld [vmem:[#allocation5 + $0x220] sm:$0xff]
    %v174 = vld [vmem:[#allocation5 + $0x228] sm:$0xff]
    %v175 = vld [vmem:[#allocation5 + $0x230] sm:$0xff]
    %v176 = vld [vmem:[#allocation5 + $0x238] sm:$0xff]
    %v177 = vld [vmem:[#allocation5 + $0x240] sm:$0xff]
    %v178 = vld [vmem:[#allocation5 + $0x248] sm:$0xff]
    %v179 = vld [vmem:[#allocation5 + $0x250] sm:$0xff]
    %v180 = vld [vmem:[#allocation5 + $0x258] sm:$0xff]
    %v181 = vld [vmem:[#allocation5 + $0x260] sm:$0xff]
    %v182 = vld [vmem:[#allocation5 + $0x268] sm:$0xff]
    %v183 = vld [vmem:[#allocation5 + $0x270] sm:$0xff]
    %v184 = vld [vmem:[#allocation5 + $0x278] sm:$0xff]
    %v185 = vld [vmem:[#allocation5 + $0x280] sm:$0xff]
    %v186 = vld [vmem:[#allocation5 + $0x288] sm:$0xff]
    %v187 = vld [vmem:[#allocation5 + $0x290] sm:$0xff]
    %v188 = vld [vmem:[#allocation5 + $0x298] sm:$0xff]
    %v189 = vld [vmem:[#allocation5 + $0x2a0] sm:$0xff]
    %v190 = vld [vmem:[#allocation5 + $0x2a8] sm:$0xff]
    %v191 = vld [vmem:[#allocation5 + $0x2b0] sm:$0xff]
    %v192 = vld [vmem:[#allocation5 + $0x2b8] sm:$0xff]
    %v193 = vld [vmem:[#allocation5 + $0x2c0] sm:$0xff]
    %v194 = vld [vmem:[#allocation5 + $0x2c8] sm:$0xff]
    %v195 = vld [vmem:[#allocation5 + $0x2d0] sm:$0xff]
    %v196 = vld [vmem:[#allocation5 + $0x2d8] sm:$0xff]
    %v197 = vld [vmem:[#allocation5 + $0x2e0] sm:$0xff]
    %v198 = vld [vmem:[#allocation5 + $0x2e8] sm:$0xff]
    %v199 = vld [vmem:[#allocation5 + $0x2f0] sm:$0xff]
    %v200 = vld [vmem:[#allocation5 + $0x2f8] sm:$0xff]
    %v201 = vld [vmem:[#allocation5 + $0x300] sm:$0xff]
    %v202 = vld [vmem:[#allocation5 + $0x308] sm:$0xff]
    %v203 = vld [vmem:[#allocation5 + $0x310] sm:$0xff]
    %v204 = vld [vmem:[#allocation5 + $0x318] sm:$0xff]
    %v205 = vld [vmem:[#allocation5 + $0x320] sm:$0xff]
    %v206 = vld [vmem:[#allocation5 + $0x328] sm:$0xff]
    %v207 = vld [vmem:[#allocation5 + $0x330] sm:$0xff]
    %v208 = vld [vmem:[#allocation5 + $0x338] sm:$0xff]
    %v209 = vld [vmem:[#allocation5 + $0x340] sm:$0xff]
    %v210 = vld [vmem:[#allocation5 + $0x348] sm:$0xff]
    %v211 = vld [vmem:[#allocation5 + $0x350] sm:$0xff]
    %v212 = vld [vmem:[#allocation5 + $0x358] sm:$0xff]
    %v213 = vld [vmem:[#allocation5 + $0x360] sm:$0xff]
    %v214 = vld [vmem:[#allocation5 + $0x368] sm:$0xff]
    %v215 = vld [vmem:[#allocation5 + $0x370] sm:$0xff]
    %v216 = vld [vmem:[#allocation5 + $0x378] sm:$0xff]
    %v217 = vld [vmem:[#allocation5 + $0x380] sm:$0xff]
    %v218 = vld [vmem:[#allocation5 + $0x388] sm:$0xff]
    %v219 = vld [vmem:[#allocation5 + $0x390] sm:$0xff]
    %v220 = vld [vmem:[#allocation5 + $0x398] sm:$0xff]
    %v221 = vld [vmem:[#allocation5 + $0x3a0] sm:$0xff]
    %v222 = vld [vmem:[#allocation5 + $0x3a8] sm:$0xff]
    %v223 = vld [vmem:[#allocation5 + $0x3b0] sm:$0xff]
    %v224 = vld [vmem:[#allocation5 + $0x3b8] sm:$0xff]
    %v225 = vld [vmem:[#allocation5 + $0x3c0] sm:$0xff]
    %v226 = vld [vmem:[#allocation5 + $0x3c8] sm:$0xff]
    %v227 = vld [vmem:[#allocation5 + $0x3d0] sm:$0xff]
    %v228 = vld [vmem:[#allocation5 + $0x3d8] sm:$0xff]
    %v229 = vld [vmem:[#allocation5 + $0x3e0] sm:$0xff]
    %v230 = vld [vmem:[#allocation5 + $0x3e8] sm:$0xff]
    %v231 = vld [vmem:[#allocation5 + $0x3f0] sm:$0xff]
    %v232 = vld [vmem:[#allocation5 + $0x3f8] sm:$0xff]
    %v233 = vld [vmem:[#allocation5 + $0x400] sm:$0xff]
    %v234 = vld [vmem:[#allocation5 + $0x408] sm:$0xff]
    %v235 = vld [vmem:[#allocation5 + $0x410] sm:$0xff]
    %v236 = vld [vmem:[#allocation5 + $0x418] sm:$0xff]
    %v237 = vld [vmem:[#allocation5 + $0x420] sm:$0xff]
    %v238 = vld [vmem:[#allocation5 + $0x428] sm:$0xff]
    %v239 = vld [vmem:[#allocation5 + $0x430] sm:$0xff]
    %v240 = vld [vmem:[#allocation5 + $0x438] sm:$0xff]
    %v241 = vld [vmem:[#allocation5 + $0x440] sm:$0xff]
    %v242 = vld [vmem:[#allocation5 + $0x448] sm:$0xff]
    %v243 = vld [vmem:[#allocation5 + $0x450] sm:$0xff]
    %v244 = vld [vmem:[#allocation5 + $0x458] sm:$0xff]
    %v245 = vld [vmem:[#allocation5 + $0x460] sm:$0xff]
    %v246 = vld [vmem:[#allocation5 + $0x468] sm:$0xff]
    %v247 = vld [vmem:[#allocation5 + $0x470] sm:$0xff]
    %v248 = vld [vmem:[#allocation5 + $0x478] sm:$0xff]
    %v249 = vld [vmem:[#allocation5 + $0x480] sm:$0xff]
    %v250 = vld [vmem:[#allocation5 + $0x488] sm:$0xff]
    %v251 = vld [vmem:[#allocation5 + $0x490] sm:$0xff]
    %v252 = vld [vmem:[#allocation5 + $0x498] sm:$0xff]
    %v253 = vld [vmem:[#allocation5 + $0x4a0] sm:$0xff]
    %v254 = vld [vmem:[#allocation5 + $0x4a8] sm:$0xff]
    %v255 = vld [vmem:[#allocation5 + $0x4b0] sm:$0xff]
    %v256 = vld [vmem:[#allocation5 + $0x4b8] sm:$0xff]
    %v257 = vld [vmem:[#allocation5 + $0x4c0] sm:$0xff]
    %v258 = vld [vmem:[#allocation5 + $0x4c8] sm:$0xff]
    %v259 = vld [vmem:[#allocation5 + $0x4d0] sm:$0xff]
    %v260 = vld [vmem:[#allocation5 + $0x4d8] sm:$0xff]
    %v261 = vld [vmem:[#allocation5 + $0x4e0] sm:$0xff]
    %v262 = vld [vmem:[#allocation5 + $0x4e8] sm:$0xff]
    %v263 = vld [vmem:[#allocation5 + $0x4f0] sm:$0xff]
    %v264 = vld [vmem:[#allocation5 + $0x4f8] sm:$0xff]
    %v265 = vld [vmem:[#allocation5 + $0x500] sm:$0xff]
    %v266 = vld [vmem:[#allocation5 + $0x508] sm:$0xff]
    %v267 = vld [vmem:[#allocation5 + $0x510] sm:$0xff]
    %v268 = vld [vmem:[#allocation5 + $0x518] sm:$0xff]
    %v269 = vld [vmem:[#allocation5 + $0x520] sm:$0xff]
    %v270 = vld [vmem:[#allocation5 + $0x528] sm:$0xff]
    %v271 = vld [vmem:[#allocation5 + $0x530] sm:$0xff]
    %v272 = vld [vmem:[#allocation5 + $0x538] sm:$0xff]
    %v273 = vld [vmem:[#allocation5 + $0x540] sm:$0xff]
    %v274 = vld [vmem:[#allocation5 + $0x548] sm:$0xff]
    %v275 = vld [vmem:[#allocation5 + $0x550] sm:$0xff]
    %v276 = vld [vmem:[#allocation5 + $0x558] sm:$0xff]
    %v277 = vld [vmem:[#allocation5 + $0x560] sm:$0xff]
    %v278 = vld [vmem:[#allocation5 + $0x568] sm:$0xff]
    %v279 = vld [vmem:[#allocation5 + $0x570] sm:$0xff]
    %v280 = vld [vmem:[#allocation5 + $0x578] sm:$0xff]
    %v281 = vld [vmem:[#allocation5 + $0x580] sm:$0xff]
    %v282 = vld [vmem:[#allocation5 + $0x588] sm:$0xff]
    %v283 = vld [vmem:[#allocation5 + $0x590] sm:$0xff]
    %v284 = vld [vmem:[#allocation5 + $0x598] sm:$0xff]
    %v285 = vld [vmem:[#allocation5 + $0x5a0] sm:$0xff]
    %v286 = vld [vmem:[#allocation5 + $0x5a8] sm:$0xff]
    %v287 = vld [vmem:[#allocation5 + $0x5b0] sm:$0xff]
    %v288 = vld [vmem:[#allocation5 + $0x5b8] sm:$0xff]
    %v289 = vld [vmem:[#allocation5 + $0x5c0] sm:$0xff]
    %v290 = vld [vmem:[#allocation5 + $0x5c8] sm:$0xff]
    %v291 = vld [vmem:[#allocation5 + $0x5d0] sm:$0xff]
    %v292 = vld [vmem:[#allocation5 + $0x5d8] sm:$0xff]
    %v293 = vld [vmem:[#allocation5 + $0x5e0] sm:$0xff]
    %v294 = vld [vmem:[#allocation5 + $0x5e8] sm:$0xff]
    %v295 = vld [vmem:[#allocation5 + $0x5f0] sm:$0xff]
    %v296 = vld [vmem:[#allocation5 + $0x5f8] sm:$0xff]
    %v297 = vld [vmem:[#allocation5 + $0x600] sm:$0xff]
    %v298 = vld [vmem:[#allocation5 + $0x608] sm:$0xff]
    %v299 = vld [vmem:[#allocation5 + $0x610] sm:$0xff]
    %v300 = vld [vmem:[#allocation5 + $0x618] sm:$0xff]
    %v301 = vld [vmem:[#allocation7] sm:$0xf]
    %v303 = vlaneseq
    %v304 = vshrl.u32 %v303, 7
    %v305 = vsub.s32 0, %v304
    %v306 = vrot.slane %v301, %v305
    %v307 = vlaneseq
    %v308 = vshrl.u32 %v307, 7
    %v309 = vsub.s32 1, %v308
    %v310 = vrot.slane %v301, %v309
    %v311 = vlaneseq
    %v312 = vshrl.u32 %v311, 7
    %v313 = vsub.s32 2, %v312
    %v314 = vrot.slane %v301, %v313
    %v315 = vlaneseq
    %v316 = vshrl.u32 %v315, 7
    %v317 = vsub.s32 3, %v316
    %v318 = vrot.slane %v301, %v317
    %v331 = vunpack.c.l.b16 %v97
    %v332 = vunpack.c.h.b16 %v97
    %v333 = vunpack.c.l.b16 %v98
    %v334 = vunpack.c.h.b16 %v98
    %v335 = vunpack.c.l.b16 %v99
    %v336 = vunpack.c.h.b16 %v99
    %v337 = vunpack.c.l.b16 %v100
    %v338 = vunpack.c.l.b16 %v101
    %v339 = vunpack.c.h.b16 %v101
    %v340 = vunpack.c.l.b16 %v102
    %v341 = vunpack.c.h.b16 %v102
    %v342 = vunpack.c.l.b16 %v103
    %v343 = vunpack.c.h.b16 %v103
    %v344 = vunpack.c.l.b16 %v104
    %v345 = vpack.c.b16 %v338, %v331
    %v346 = vpack.c.b16 %v339, %v332
    %v347 = vpack.c.b16 %v340, %v333
    %v348 = vpack.c.b16 %v341, %v334
    %v349 = vpack.c.b16 %v342, %v335
    %v350 = vpack.c.b16 %v343, %v336
    %v351 = vpack.c.b16 %v344, %v337
    %v554 = vunpack.c.l.b16 %v105
    %v555 = vunpack.c.h.b16 %v105
    %v556 = vunpack.c.l.b16 %v106
    %v557 = vunpack.c.h.b16 %v106
    %v558 = vunpack.c.l.b16 %v107
    %v559 = vunpack.c.h.b16 %v107
    %v560 = vunpack.c.l.b16 %v108
    %v561 = vunpack.c.h.b16 %v108
    %v562 = vunpack.c.l.b16 %v109
    %v563 = vunpack.c.h.b16 %v109
    %v564 = vunpack.c.l.b16 %v110
    %v565 = vunpack.c.h.b16 %v110
    %v566 = vunpack.c.l.b16 %v111
    %v567 = vunpack.c.h.b16 %v111
    %v568 = vunpack.c.l.b16 %v112
    %v569 = vunpack.c.h.b16 %v112
    %v570 = vunpack.c.l.b16 %v113
    %v571 = vunpack.c.h.b16 %v113
    %v572 = vunpack.c.l.b16 %v114
    %v573 = vunpack.c.h.b16 %v114
    %v574 = vunpack.c.l.b16 %v115
    %v575 = vunpack.c.h.b16 %v115
    %v576 = vunpack.c.l.b16 %v116
    %v577 = vunpack.c.h.b16 %v116
    %v578 = vunpack.c.l.b16 %v117
    %v579 = vunpack.c.h.b16 %v117
    %v580 = vunpack.c.l.b16 %v118
    %v581 = vunpack.c.h.b16 %v118
    %v582 = vunpack.c.l.b16 %v119
    %v583 = vunpack.c.h.b16 %v119
    %v584 = vunpack.c.l.b16 %v120
    %v585 = vunpack.c.h.b16 %v120
    %v586 = vunpack.c.l.b16 %v121
    %v587 = vunpack.c.h.b16 %v121
    %v588 = vunpack.c.l.b16 %v122
    %v589 = vunpack.c.h.b16 %v122
    %v590 = vunpack.c.l.b16 %v123
    %v591 = vunpack.c.h.b16 %v123
    %v592 = vunpack.c.l.b16 %v124
    %v593 = vunpack.c.h.b16 %v124
    %v594 = vunpack.c.l.b16 %v125
    %v595 = vunpack.c.h.b16 %v125
    %v596 = vunpack.c.l.b16 %v126
    %v597 = vunpack.c.h.b16 %v126
    %v598 = vunpack.c.l.b16 %v127
    %v599 = vunpack.c.h.b16 %v127
    %v600 = vunpack.c.l.b16 %v128
    %v601 = vunpack.c.h.b16 %v128
    %v602 = vunpack.c.l.b16 %v129
    %v603 = vunpack.c.h.b16 %v129
    %v604 = vunpack.c.l.b16 %v130
    %v605 = vunpack.c.h.b16 %v130
    %v606 = vunpack.c.l.b16 %v131
    %v607 = vunpack.c.h.b16 %v131
    %v608 = vunpack.c.l.b16 %v132
    %v609 = vunpack.c.h.b16 %v132
    %v610 = vunpack.c.l.b16 %v133
    %v611 = vunpack.c.h.b16 %v133
    %v612 = vunpack.c.l.b16 %v134
    %v613 = vunpack.c.h.b16 %v134
    %v614 = vunpack.c.l.b16 %v135
    %v615 = vunpack.c.h.b16 %v135
    %v616 = vunpack.c.l.b16 %v136
    %v617 = vunpack.c.h.b16 %v136
    %v618 = vunpack.c.l.b16 %v137
    %v619 = vunpack.c.h.b16 %v137
    %v620 = vunpack.c.l.b16 %v138
    %v621 = vunpack.c.h.b16 %v138
    %v622 = vunpack.c.l.b16 %v139
    %v623 = vunpack.c.h.b16 %v139
    %v624 = vunpack.c.l.b16 %v140
    %v625 = vunpack.c.h.b16 %v140
    %v626 = vunpack.c.l.b16 %v141
    %v627 = vunpack.c.h.b16 %v141
    %v628 = vunpack.c.l.b16 %v142
    %v629 = vunpack.c.h.b16 %v142
    %v630 = vunpack.c.l.b16 %v143
    %v631 = vunpack.c.h.b16 %v143
    %v632 = vunpack.c.l.b16 %v144
    %v633 = vunpack.c.h.b16 %v144
    %v634 = vunpack.c.l.b16 %v145
    %v635 = vunpack.c.h.b16 %v145
    %v636 = vunpack.c.l.b16 %v146
    %v637 = vunpack.c.h.b16 %v146
    %v638 = vunpack.c.l.b16 %v147
    %v639 = vunpack.c.h.b16 %v147
    %v640 = vunpack.c.l.b16 %v148
    %v641 = vunpack.c.h.b16 %v148
    %v642 = vunpack.c.l.b16 %v149
    %v643 = vunpack.c.h.b16 %v149
    %v644 = vunpack.c.l.b16 %v150
    %v645 = vunpack.c.h.b16 %v150
    %v646 = vunpack.c.l.b16 %v151
    %v647 = vunpack.c.h.b16 %v151
    %v648 = vunpack.c.l.b16 %v152
    %v649 = vunpack.c.h.b16 %v152
    %v650 = vunpack.c.l.b16 %v153
    %v651 = vunpack.c.h.b16 %v153
    %v652 = vunpack.c.l.b16 %v154
    %v653 = vunpack.c.h.b16 %v154
    %v654 = vunpack.c.l.b16 %v155
    %v655 = vunpack.c.h.b16 %v155
    %v656 = vunpack.c.l.b16 %v156
    %v657 = vunpack.c.h.b16 %v156
    %v658 = vunpack.c.l.b16 %v157
    %v659 = vunpack.c.h.b16 %v157
    %v660 = vunpack.c.l.b16 %v158
    %v661 = vunpack.c.h.b16 %v158
    %v662 = vunpack.c.l.b16 %v159
    %v663 = vunpack.c.h.b16 %v159
    %v664 = vunpack.c.l.b16 %v160
    %v665 = vunpack.c.h.b16 %v160
    %v666 = vunpack.c.l.b16 %v161
    %v667 = vunpack.c.h.b16 %v161
    %v668 = vunpack.c.l.b16 %v162
    %v669 = vunpack.c.h.b16 %v162
    %v670 = vunpack.c.l.b16 %v163
    %v671 = vunpack.c.h.b16 %v163
    %v672 = vunpack.c.l.b16 %v164
    %v673 = vunpack.c.h.b16 %v164
    %v674 = vunpack.c.l.b16 %v165
    %v675 = vunpack.c.h.b16 %v165
    %v676 = vunpack.c.l.b16 %v166
    %v677 = vunpack.c.h.b16 %v166
    %v678 = vunpack.c.l.b16 %v167
    %v679 = vunpack.c.h.b16 %v167
    %v680 = vunpack.c.l.b16 %v168
    %v681 = vunpack.c.h.b16 %v168
    %v682 = vunpack.c.l.b16 %v169
    %v683 = vunpack.c.h.b16 %v169
    %v684 = vunpack.c.l.b16 %v170
    %v685 = vunpack.c.h.b16 %v170
    %v686 = vunpack.c.l.b16 %v171
    %v687 = vunpack.c.h.b16 %v171
    %v688 = vunpack.c.l.b16 %v172
    %v689 = vunpack.c.h.b16 %v172
    %v690 = vunpack.c.l.b16 %v173
    %v691 = vunpack.c.h.b16 %v173
    %v692 = vunpack.c.l.b16 %v174
    %v693 = vunpack.c.h.b16 %v174
    %v694 = vunpack.c.l.b16 %v175
    %v695 = vunpack.c.h.b16 %v175
    %v696 = vunpack.c.l.b16 %v176
    %v697 = vunpack.c.h.b16 %v176
    %v698 = vunpack.c.l.b16 %v177
    %v699 = vunpack.c.h.b16 %v177
    %v700 = vunpack.c.l.b16 %v178
    %v701 = vunpack.c.h.b16 %v178
    %v702 = vunpack.c.l.b16 %v179
    %v703 = vunpack.c.h.b16 %v179
    %v704 = vunpack.c.l.b16 %v180
    %v705 = vunpack.c.h.b16 %v180
    %v706 = vunpack.c.l.b16 %v181
    %v707 = vunpack.c.h.b16 %v181
    %v708 = vunpack.c.l.b16 %v182
    %v709 = vunpack.c.h.b16 %v182
    %v710 = vunpack.c.l.b16 %v183
    %v711 = vunpack.c.h.b16 %v183
    %v712 = vunpack.c.l.b16 %v184
    %v713 = vunpack.c.h.b16 %v184
    %v714 = vunpack.c.l.b16 %v185
    %v715 = vunpack.c.h.b16 %v185
    %v716 = vunpack.c.l.b16 %v186
    %v717 = vunpack.c.h.b16 %v186
    %v718 = vunpack.c.l.b16 %v187
    %v719 = vunpack.c.h.b16 %v187
    %v720 = vunpack.c.l.b16 %v188
    %v721 = vunpack.c.h.b16 %v188
    %v722 = vunpack.c.l.b16 %v189
    %v723 = vunpack.c.h.b16 %v189
    %v724 = vunpack.c.l.b16 %v190
    %v725 = vunpack.c.h.b16 %v190
    %v726 = vunpack.c.l.b16 %v191
    %v727 = vunpack.c.h.b16 %v191
    %v728 = vunpack.c.l.b16 %v192
    %v729 = vunpack.c.h.b16 %v192
    %v730 = vunpack.c.l.b16 %v193
    %v731 = vunpack.c.h.b16 %v193
    %v732 = vunpack.c.l.b16 %v194
    %v733 = vunpack.c.h.b16 %v194
    %v734 = vunpack.c.l.b16 %v195
    %v735 = vunpack.c.h.b16 %v195
    %v736 = vunpack.c.l.b16 %v196
    %v737 = vunpack.c.h.b16 %v196
    %v738 = vunpack.c.l.b16 %v197
    %v739 = vunpack.c.h.b16 %v197
    %v740 = vunpack.c.l.b16 %v198
    %v741 = vunpack.c.h.b16 %v198
    %v742 = vunpack.c.l.b16 %v199
    %v743 = vunpack.c.h.b16 %v199
    %v744 = vunpack.c.l.b16 %v200
    %v745 = vunpack.c.h.b16 %v200
    %v746 = vunpack.c.l.b16 %v201
    %v747 = vunpack.c.h.b16 %v201
    %v748 = vunpack.c.l.b16 %v202
    %v749 = vunpack.c.h.b16 %v202
    %v750 = vunpack.c.l.b16 %v203
    %v751 = vunpack.c.h.b16 %v203
    %v752 = vunpack.c.l.b16 %v204
    %v753 = vunpack.c.h.b16 %v204
    %v754 = vunpack.c.l.b16 %v205
    %v755 = vunpack.c.h.b16 %v205
    %v756 = vunpack.c.l.b16 %v206
    %v757 = vunpack.c.h.b16 %v206
    %v758 = vunpack.c.l.b16 %v207
    %v759 = vunpack.c.h.b16 %v207
    %v760 = vunpack.c.l.b16 %v208
    %v761 = vunpack.c.h.b16 %v208
    %v762 = vunpack.c.l.b16 %v209
    %v763 = vunpack.c.h.b16 %v209
    %v764 = vunpack.c.l.b16 %v210
    %v765 = vunpack.c.h.b16 %v210
    %v766 = vunpack.c.l.b16 %v211
    %v767 = vunpack.c.h.b16 %v211
    %v768 = vunpack.c.l.b16 %v212
    %v769 = vunpack.c.h.b16 %v212
    %v770 = vunpack.c.l.b16 %v213
    %v771 = vunpack.c.h.b16 %v213
    %v772 = vunpack.c.l.b16 %v214
    %v773 = vunpack.c.h.b16 %v214
    %v774 = vunpack.c.l.b16 %v215
    %v775 = vunpack.c.h.b16 %v215
    %v776 = vunpack.c.l.b16 %v216
    %v777 = vunpack.c.h.b16 %v216
    %v778 = vunpack.c.l.b16 %v217
    %v779 = vunpack.c.h.b16 %v217
    %v780 = vunpack.c.l.b16 %v218
    %v781 = vunpack.c.h.b16 %v218
    %v782 = vunpack.c.l.b16 %v219
    %v783 = vunpack.c.h.b16 %v219
    %v784 = vunpack.c.l.b16 %v220
    %v785 = vunpack.c.h.b16 %v220
    %v786 = vunpack.c.l.b16 %v221
    %v787 = vunpack.c.h.b16 %v221
    %v788 = vunpack.c.l.b16 %v222
    %v789 = vunpack.c.h.b16 %v222
    %v790 = vunpack.c.l.b16 %v223
    %v791 = vunpack.c.h.b16 %v223
    %v792 = vunpack.c.l.b16 %v224
    %v793 = vunpack.c.h.b16 %v224
    %v794 = vunpack.c.l.b16 %v225
    %v795 = vunpack.c.h.b16 %v225
    %v796 = vunpack.c.l.b16 %v226
    %v797 = vunpack.c.h.b16 %v226
    %v798 = vunpack.c.l.b16 %v227
    %v799 = vunpack.c.h.b16 %v227
    %v800 = vunpack.c.l.b16 %v228
    %v801 = vunpack.c.h.b16 %v228
    %v802 = vunpack.c.l.b16 %v229
    %v803 = vunpack.c.h.b16 %v229
    %v804 = vunpack.c.l.b16 %v230
    %v805 = vunpack.c.h.b16 %v230
    %v806 = vunpack.c.l.b16 %v231
    %v807 = vunpack.c.h.b16 %v231
    %v808 = vunpack.c.l.b16 %v232
    %v809 = vunpack.c.h.b16 %v232
    %v810 = vunpack.c.l.b16 %v233
    %v811 = vunpack.c.h.b16 %v233
    %v812 = vunpack.c.l.b16 %v234
    %v813 = vunpack.c.h.b16 %v234
    %v814 = vunpack.c.l.b16 %v235
    %v815 = vunpack.c.h.b16 %v235
    %v816 = vunpack.c.l.b16 %v236
    %v817 = vunpack.c.h.b16 %v236
    %v818 = vunpack.c.l.b16 %v237
    %v819 = vunpack.c.h.b16 %v237
    %v820 = vunpack.c.l.b16 %v238
    %v821 = vunpack.c.h.b16 %v238
    %v822 = vunpack.c.l.b16 %v239
    %v823 = vunpack.c.h.b16 %v239
    %v824 = vunpack.c.l.b16 %v240
    %v825 = vunpack.c.h.b16 %v240
    %v826 = vunpack.c.l.b16 %v241
    %v827 = vunpack.c.h.b16 %v241
    %v828 = vunpack.c.l.b16 %v242
    %v829 = vunpack.c.h.b16 %v242
    %v830 = vunpack.c.l.b16 %v243
    %v831 = vunpack.c.h.b16 %v243
    %v832 = vunpack.c.l.b16 %v244
    %v833 = vunpack.c.h.b16 %v244
    %v834 = vunpack.c.l.b16 %v245
    %v835 = vunpack.c.h.b16 %v245
    %v836 = vunpack.c.l.b16 %v246
    %v837 = vunpack.c.h.b16 %v246
    %v838 = vunpack.c.l.b16 %v247
    %v839 = vunpack.c.h.b16 %v247
    %v840 = vunpack.c.l.b16 %v248
    %v841 = vunpack.c.h.b16 %v248
    %v842 = vunpack.c.l.b16 %v249
    %v843 = vunpack.c.h.b16 %v249
    %v844 = vunpack.c.l.b16 %v250
    %v845 = vunpack.c.h.b16 %v250
    %v846 = vunpack.c.l.b16 %v251
    %v847 = vunpack.c.h.b16 %v251
    %v848 = vunpack.c.l.b16 %v252
    %v849 = vunpack.c.h.b16 %v252
    %v850 = vunpack.c.l.b16 %v253
    %v851 = vunpack.c.h.b16 %v253
    %v852 = vunpack.c.l.b16 %v254
    %v853 = vunpack.c.h.b16 %v254
    %v854 = vunpack.c.l.b16 %v255
    %v855 = vunpack.c.h.b16 %v255
    %v856 = vunpack.c.l.b16 %v256
    %v857 = vunpack.c.h.b16 %v256
    %v858 = vunpack.c.l.b16 %v257
    %v859 = vunpack.c.h.b16 %v257
    %v860 = vunpack.c.l.b16 %v258
    %v861 = vunpack.c.h.b16 %v258
    %v862 = vunpack.c.l.b16 %v259
    %v863 = vunpack.c.h.b16 %v259
    %v864 = vunpack.c.l.b16 %v260
    %v865 = vunpack.c.h.b16 %v260
    %v866 = vunpack.c.l.b16 %v261
    %v867 = vunpack.c.h.b16 %v261
    %v868 = vunpack.c.l.b16 %v262
    %v869 = vunpack.c.h.b16 %v262
    %v870 = vunpack.c.l.b16 %v263
    %v871 = vunpack.c.h.b16 %v263
    %v872 = vunpack.c.l.b16 %v264
    %v873 = vunpack.c.h.b16 %v264
    %v874 = vunpack.c.l.b16 %v265
    %v875 = vunpack.c.h.b16 %v265
    %v876 = vunpack.c.l.b16 %v266
    %v877 = vunpack.c.h.b16 %v266
    %v878 = vunpack.c.l.b16 %v267
    %v879 = vunpack.c.h.b16 %v267
    %v880 = vunpack.c.l.b16 %v268
    %v881 = vunpack.c.h.b16 %v268
    %v882 = vunpack.c.l.b16 %v269
    %v883 = vunpack.c.h.b16 %v269
    %v884 = vunpack.c.l.b16 %v270
    %v885 = vunpack.c.h.b16 %v270
    %v886 = vunpack.c.l.b16 %v271
    %v887 = vunpack.c.h.b16 %v271
    %v888 = vunpack.c.l.b16 %v272
    %v889 = vunpack.c.h.b16 %v272
    %v890 = vunpack.c.l.b16 %v273
    %v891 = vunpack.c.h.b16 %v273
    %v892 = vunpack.c.l.b16 %v274
    %v893 = vunpack.c.h.b16 %v274
    %v894 = vunpack.c.l.b16 %v275
    %v895 = vunpack.c.h.b16 %v275
    %v896 = vunpack.c.l.b16 %v276
    %v897 = vunpack.c.h.b16 %v276
    %v898 = vunpack.c.l.b16 %v277
    %v899 = vunpack.c.h.b16 %v277
    %v900 = vunpack.c.l.b16 %v278
    %v901 = vunpack.c.h.b16 %v278
    %v902 = vunpack.c.l.b16 %v279
    %v903 = vunpack.c.h.b16 %v279
    %v904 = vunpack.c.l.b16 %v280
    %v905 = vunpack.c.h.b16 %v280
    %v906 = vunpack.c.l.b16 %v281
    %v907 = vunpack.c.h.b16 %v281
    %v908 = vunpack.c.l.b16 %v282
    %v909 = vunpack.c.h.b16 %v282
    %v910 = vunpack.c.l.b16 %v283
    %v911 = vunpack.c.h.b16 %v283
    %v912 = vunpack.c.l.b16 %v284
    %v913 = vunpack.c.h.b16 %v284
    %v914 = vunpack.c.l.b16 %v285
    %v915 = vunpack.c.h.b16 %v285
    %v916 = vunpack.c.l.b16 %v286
    %v917 = vunpack.c.h.b16 %v286
    %v918 = vunpack.c.l.b16 %v287
    %v919 = vunpack.c.h.b16 %v287
    %v920 = vunpack.c.l.b16 %v288
    %v921 = vunpack.c.h.b16 %v288
    %v922 = vunpack.c.l.b16 %v289
    %v923 = vunpack.c.h.b16 %v289
    %v924 = vunpack.c.l.b16 %v290
    %v925 = vunpack.c.h.b16 %v290
    %v926 = vunpack.c.l.b16 %v291
    %v927 = vunpack.c.h.b16 %v291
    %v928 = vunpack.c.l.b16 %v292
    %v929 = vunpack.c.h.b16 %v292
    %v930 = vunpack.c.l.b16 %v293
    %v931 = vunpack.c.h.b16 %v293
    %v932 = vunpack.c.l.b16 %v294
    %v933 = vunpack.c.h.b16 %v294
    %v934 = vunpack.c.l.b16 %v295
    %v935 = vunpack.c.h.b16 %v295
    %v936 = vunpack.c.l.b16 %v296
    %v937 = vunpack.c.h.b16 %v296
    %v938 = vunpack.c.l.b16 %v297
    %v939 = vunpack.c.h.b16 %v297
    %v940 = vunpack.c.l.b16 %v298
    %v941 = vunpack.c.h.b16 %v298
    %v942 = vunpack.c.l.b16 %v299
    %v943 = vunpack.c.h.b16 %v299
    %v944 = vunpack.c.l.b16 %v300
    %v945 = vunpack.c.h.b16 %v300
    %v946 = vpack.c.b16 %v558, %v554
    %v947 = vpack.c.b16 %v559, %v555
    %v948 = vpack.c.b16 %v560, %v556
    %v949 = vpack.c.b16 %v561, %v557
    %v950 = vpack.c.b16 %v566, %v562
    %v951 = vpack.c.b16 %v567, %v563
    %v952 = vpack.c.b16 %v568, %v564
    %v953 = vpack.c.b16 %v569, %v565
    %v954 = vpack.c.b16 %v574, %v570
    %v955 = vpack.c.b16 %v575, %v571
    %v956 = vpack.c.b16 %v576, %v572
    %v957 = vpack.c.b16 %v577, %v573
    %v958 = vpack.c.b16 %v582, %v578
    %v959 = vpack.c.b16 %v583, %v579
    %v960 = vpack.c.b16 %v584, %v580
    %v961 = vpack.c.b16 %v585, %v581
    %v962 = vpack.c.b16 %v590, %v586
    %v963 = vpack.c.b16 %v591, %v587
    %v964 = vpack.c.b16 %v592, %v588
    %v965 = vpack.c.b16 %v593, %v589
    %v966 = vpack.c.b16 %v598, %v594
    %v967 = vpack.c.b16 %v599, %v595
    %v968 = vpack.c.b16 %v600, %v596
    %v969 = vpack.c.b16 %v601, %v597
    %v970 = vpack.c.b16 %v606, %v602
    %v971 = vpack.c.b16 %v607, %v603
    %v972 = vpack.c.b16 %v608, %v604
    %v973 = vpack.c.b16 %v609, %v605
    %v974 = vpack.c.b16 %v614, %v610
    %v975 = vpack.c.b16 %v615, %v611
    %v976 = vpack.c.b16 %v616, %v612
    %v977 = vpack.c.b16 %v617, %v613
    %v978 = vpack.c.b16 %v622, %v618
    %v979 = vpack.c.b16 %v623, %v619
    %v980 = vpack.c.b16 %v624, %v620
    %v981 = vpack.c.b16 %v625, %v621
    %v982 = vpack.c.b16 %v630, %v626
    %v983 = vpack.c.b16 %v631, %v627
    %v984 = vpack.c.b16 %v632, %v628
    %v985 = vpack.c.b16 %v633, %v629
    %v986 = vpack.c.b16 %v638, %v634
    %v987 = vpack.c.b16 %v639, %v635
    %v988 = vpack.c.b16 %v640, %v636
    %v989 = vpack.c.b16 %v641, %v637
    %v990 = vpack.c.b16 %v646, %v642
    %v991 = vpack.c.b16 %v647, %v643
    %v992 = vpack.c.b16 %v648, %v644
    %v993 = vpack.c.b16 %v649, %v645
    %v994 = vpack.c.b16 %v654, %v650
    %v995 = vpack.c.b16 %v655, %v651
    %v996 = vpack.c.b16 %v656, %v652
    %v997 = vpack.c.b16 %v657, %v653
    %v998 = vpack.c.b16 %v662, %v658
    %v999 = vpack.c.b16 %v663, %v659
    %v1000 = vpack.c.b16 %v664, %v660
    %v1001 = vpack.c.b16 %v665, %v661
    %v1002 = vpack.c.b16 %v670, %v666
    %v1003 = vpack.c.b16 %v671, %v667
    %v1004 = vpack.c.b16 %v672, %v668
    %v1005 = vpack.c.b16 %v673, %v669
    %v1006 = vpack.c.b16 %v678, %v674
    %v1007 = vpack.c.b16 %v679, %v675
    %v1008 = vpack.c.b16 %v680, %v676
    %v1009 = vpack.c.b16 %v681, %v677
    %v1010 = vpack.c.b16 %v686, %v682
    %v1011 = vpack.c.b16 %v687, %v683
    %v1012 = vpack.c.b16 %v688, %v684
    %v1013 = vpack.c.b16 %v689, %v685
    %v1014 = vpack.c.b16 %v694, %v690
    %v1015 = vpack.c.b16 %v695, %v691
    %v1016 = vpack.c.b16 %v696, %v692
    %v1017 = vpack.c.b16 %v697, %v693
    %v1018 = vpack.c.b16 %v702, %v698
    %v1019 = vpack.c.b16 %v703, %v699
    %v1020 = vpack.c.b16 %v704, %v700
    %v1021 = vpack.c.b16 %v705, %v701
    %v1022 = vpack.c.b16 %v710, %v706
    %v1023 = vpack.c.b16 %v711, %v707
    %v1024 = vpack.c.b16 %v712, %v708
    %v1025 = vpack.c.b16 %v713, %v709
    %v1026 = vpack.c.b16 %v718, %v714
    %v1027 = vpack.c.b16 %v719, %v715
    %v1028 = vpack.c.b16 %v720, %v716
    %v1029 = vpack.c.b16 %v721, %v717
    %v1030 = vpack.c.b16 %v726, %v722
    %v1031 = vpack.c.b16 %v727, %v723
    %v1032 = vpack.c.b16 %v728, %v724
    %v1033 = vpack.c.b16 %v729, %v725
    %v1034 = vpack.c.b16 %v734, %v730
    %v1035 = vpack.c.b16 %v735, %v731
    %v1036 = vpack.c.b16 %v736, %v732
    %v1037 = vpack.c.b16 %v737, %v733
    %v1038 = vpack.c.b16 %v742, %v738
    %v1039 = vpack.c.b16 %v743, %v739
    %v1040 = vpack.c.b16 %v744, %v740
    %v1041 = vpack.c.b16 %v745, %v741
    %v1042 = vpack.c.b16 %v750, %v746
    %v1043 = vpack.c.b16 %v751, %v747
    %v1044 = vpack.c.b16 %v752, %v748
    %v1045 = vpack.c.b16 %v753, %v749
    %v1046 = vpack.c.b16 %v758, %v754
    %v1047 = vpack.c.b16 %v759, %v755
    %v1048 = vpack.c.b16 %v760, %v756
    %v1049 = vpack.c.b16 %v761, %v757
    %v1050 = vpack.c.b16 %v766, %v762
    %v1051 = vpack.c.b16 %v767, %v763
    %v1052 = vpack.c.b16 %v768, %v764
    %v1053 = vpack.c.b16 %v769, %v765
    %v1054 = vpack.c.b16 %v774, %v770
    %v1055 = vpack.c.b16 %v775, %v771
    %v1056 = vpack.c.b16 %v776, %v772
    %v1057 = vpack.c.b16 %v777, %v773
    %v1058 = vpack.c.b16 %v782, %v778
    %v1059 = vpack.c.b16 %v783, %v779
    %v1060 = vpack.c.b16 %v784, %v780
    %v1061 = vpack.c.b16 %v785, %v781
    %v1062 = vpack.c.b16 %v790, %v786
    %v1063 = vpack.c.b16 %v791, %v787
    %v1064 = vpack.c.b16 %v792, %v788
    %v1065 = vpack.c.b16 %v793, %v789
    %v1066 = vpack.c.b16 %v798, %v794
    %v1067 = vpack.c.b16 %v799, %v795
    %v1068 = vpack.c.b16 %v800, %v796
    %v1069 = vpack.c.b16 %v801, %v797
    %v1070 = vpack.c.b16 %v806, %v802
    %v1071 = vpack.c.b16 %v807, %v803
    %v1072 = vpack.c.b16 %v808, %v804
    %v1073 = vpack.c.b16 %v809, %v805
    %v1074 = vpack.c.b16 %v814, %v810
    %v1075 = vpack.c.b16 %v815, %v811
    %v1076 = vpack.c.b16 %v816, %v812
    %v1077 = vpack.c.b16 %v817, %v813
    %v1078 = vpack.c.b16 %v822, %v818
    %v1079 = vpack.c.b16 %v823, %v819
    %v1080 = vpack.c.b16 %v824, %v820
    %v1081 = vpack.c.b16 %v825, %v821
    %v1082 = vpack.c.b16 %v830, %v826
    %v1083 = vpack.c.b16 %v831, %v827
    %v1084 = vpack.c.b16 %v832, %v828
    %v1085 = vpack.c.b16 %v833, %v829
    %v1086 = vpack.c.b16 %v838, %v834
    %v1087 = vpack.c.b16 %v839, %v835
    %v1088 = vpack.c.b16 %v840, %v836
    %v1089 = vpack.c.b16 %v841, %v837
    %v1090 = vpack.c.b16 %v846, %v842
    %v1091 = vpack.c.b16 %v847, %v843
    %v1092 = vpack.c.b16 %v848, %v844
    %v1093 = vpack.c.b16 %v849, %v845
    %v1094 = vpack.c.b16 %v854, %v850
    %v1095 = vpack.c.b16 %v855, %v851
    %v1096 = vpack.c.b16 %v856, %v852
    %v1097 = vpack.c.b16 %v857, %v853
    %v1098 = vpack.c.b16 %v862, %v858
    %v1099 = vpack.c.b16 %v863, %v859
    %v1100 = vpack.c.b16 %v864, %v860
    %v1101 = vpack.c.b16 %v865, %v861
    %v1102 = vpack.c.b16 %v870, %v866
    %v1103 = vpack.c.b16 %v871, %v867
    %v1104 = vpack.c.b16 %v872, %v868
    %v1105 = vpack.c.b16 %v873, %v869
    %v1106 = vpack.c.b16 %v878, %v874
    %v1107 = vpack.c.b16 %v879, %v875
    %v1108 = vpack.c.b16 %v880, %v876
    %v1109 = vpack.c.b16 %v881, %v877
    %v1110 = vpack.c.b16 %v886, %v882
    %v1111 = vpack.c.b16 %v887, %v883
    %v1112 = vpack.c.b16 %v888, %v884
    %v1113 = vpack.c.b16 %v889, %v885
    %v1114 = vpack.c.b16 %v894, %v890
    %v1115 = vpack.c.b16 %v895, %v891
    %v1116 = vpack.c.b16 %v896, %v892
    %v1117 = vpack.c.b16 %v897, %v893
    %v1118 = vpack.c.b16 %v902, %v898
    %v1119 = vpack.c.b16 %v903, %v899
    %v1120 = vpack.c.b16 %v904, %v900
    %v1121 = vpack.c.b16 %v905, %v901
    %v1122 = vpack.c.b16 %v910, %v906
    %v1123 = vpack.c.b16 %v911, %v907
    %v1124 = vpack.c.b16 %v912, %v908
    %v1125 = vpack.c.b16 %v913, %v909
    %v1126 = vpack.c.b16 %v918, %v914
    %v1127 = vpack.c.b16 %v919, %v915
    %v1128 = vpack.c.b16 %v920, %v916
    %v1129 = vpack.c.b16 %v921, %v917
    %v1130 = vpack.c.b16 %v926, %v922
    %v1131 = vpack.c.b16 %v927, %v923
    %v1132 = vpack.c.b16 %v928, %v924
    %v1133 = vpack.c.b16 %v929, %v925
    %v1134 = vpack.c.b16 %v934, %v930
    %v1135 = vpack.c.b16 %v935, %v931
    %v1136 = vpack.c.b16 %v936, %v932
    %v1137 = vpack.c.b16 %v937, %v933
    %v1138 = vpack.c.b16 %v942, %v938
    %v1139 = vpack.c.b16 %v943, %v939
    %v1140 = vpack.c.b16 %v944, %v940
    %v1141 = vpack.c.b16 %v945, %v941
    %vm1338 = vcmask 130048
    %v1340 = vsel %vm1338, %v351, 0
    %1342 = vmatprep.subr.bf16.mxu0 %v975
    %1343 = vmatpush1.bf16.msra.mxu0 %v974
    %1344 = vmatprep.subr.bf16.mxu0 %v971
    %1345 = vmatpush1.bf16.msra.mxu0 %v970
    %1346 = vmatprep.subr.bf16.mxu0 %v967
    %1347 = vmatpush1.bf16.msra.mxu0 %v966
    %1348 = vmatprep.subr.bf16.mxu0 %v963
    %1349 = vmatpush1.bf16.msra.mxu0 %v962
    %1350 = vmatprep.subr.bf16.mxu0 %v959
    %1351 = vmatpush1.bf16.msra.mxu0 %v958
    %1352 = vmatprep.subr.bf16.mxu0 %v955
    %1353 = vmatpush1.bf16.msra.mxu0 %v954
    %1354 = vmatprep.subr.bf16.mxu0 %v951
    %1355 = vmatpush1.bf16.msra.mxu0 %v950
    %1356 = vmatprep.subr.bf16.mxu0 %v947
    %1357 = vmatpush1.bf16.msra.mxu0 %v946
    %1358 = vmatprep.subr.bf16.mxu0 %v1007
    %1359 = vmatpush2.bf16.msra.mxu0 %v1006
    %1360 = vmatprep.subr.bf16.mxu0 %v1003
    %1361 = vmatpush2.bf16.msra.mxu0 %v1002
    %1362 = vmatprep.subr.bf16.mxu0 %v999
    %1363 = vmatpush2.bf16.msra.mxu0 %v998
    %1364 = vmatprep.subr.bf16.mxu0 %v995
    %1365 = vmatpush2.bf16.msra.mxu0 %v994
    %1366 = vmatprep.subr.bf16.mxu0 %v991
    %1367 = vmatpush2.bf16.msra.mxu0 %v990
    %1368 = vmatprep.subr.bf16.mxu0 %v987
    %1369 = vmatpush2.bf16.msra.mxu0 %v986
    %1370 = vmatprep.subr.bf16.mxu0 %v983
    %1371 = vmatpush2.bf16.msra.mxu0 %v982
    %1372 = vmatprep.subr.bf16.mxu0 %v979
    %1373 = vmatpush2.bf16.msra.mxu0 %v978
    %1374 = vmatprep.mubr.bf16.mxu0 %v346
    %1375 = vmatmul.mubr.bf16.gmra.mxu0 %v345
    %v1376 = vpop.f32.mrf.mxu0
    %v1377 = vadd.f32 %v306, %v1376
    %v1378 = vpop.f32.mrf.mxu0
    %v1379 = vadd.f32 %v310, %v1378
    %v1380 = vpop.f32.mrf.mxu0
    %v1381 = vadd.f32 %v306, %v1380
    %v1382 = vpop.f32.mrf.mxu0
    %v1383 = vadd.f32 %v310, %v1382
    %1384 = vdwg.mxu0
    %1385 = vmatprep.subr.bf16.mxu0 %v1039
    %1386 = vmatpush1.bf16.msra.mxu0 %v1038
    %1387 = vmatprep.subr.bf16.mxu0 %v1035
    %1388 = vmatpush1.bf16.msra.mxu0 %v1034
    %1389 = vmatprep.subr.bf16.mxu0 %v1031
    %1390 = vmatpush1.bf16.msra.mxu0 %v1030
    %1391 = vmatprep.subr.bf16.mxu0 %v1027
    %1392 = vmatpush1.bf16.msra.mxu0 %v1026
    %1393 = vmatprep.subr.bf16.mxu0 %v1023
    %1394 = vmatpush1.bf16.msra.mxu0 %v1022
    %1395 = vmatprep.subr.bf16.mxu0 %v1019
    %1396 = vmatpush1.bf16.msra.mxu0 %v1018
    %1397 = vmatprep.subr.bf16.mxu0 %v1015
    %1398 = vmatpush1.bf16.msra.mxu0 %v1014
    %1399 = vmatprep.subr.bf16.mxu0 %v1011
    %1400 = vmatpush1.bf16.msra.mxu0 %v1010
    %1401 = vmatprep.subr.bf16.mxu0 %v1071
    %1402 = vmatpush2.bf16.msra.mxu0 %v1070
    %1403 = vmatprep.subr.bf16.mxu0 %v1067
    %1404 = vmatpush2.bf16.msra.mxu0 %v1066
    %1405 = vmatprep.subr.bf16.mxu0 %v1063
    %1406 = vmatpush2.bf16.msra.mxu0 %v1062
    %1407 = vmatprep.subr.bf16.mxu0 %v1059
    %1408 = vmatpush2.bf16.msra.mxu0 %v1058
    %1409 = vmatprep.subr.bf16.mxu0 %v1055
    %1410 = vmatpush2.bf16.msra.mxu0 %v1054
    %1411 = vmatprep.subr.bf16.mxu0 %v1051
    %1412 = vmatpush2.bf16.msra.mxu0 %v1050
    %1413 = vmatprep.subr.bf16.mxu0 %v1047
    %1414 = vmatpush2.bf16.msra.mxu0 %v1046
    %1415 = vmatprep.subr.bf16.mxu0 %v1043
    %1416 = vmatpush2.bf16.msra.mxu0 %v1042
    %1417 = vmatprep.mubr.bf16.mxu0 %v348
    %1418 = vmatmul.mubr.bf16.gmra.mxu0 %v347
    %v1419 = vpop.f32.mrf.mxu0
    %v1420 = vadd.f32 %v1377, %v1419
    %v1421 = vpop.f32.mrf.mxu0
    %v1422 = vadd.f32 %v1379, %v1421
    %v1423 = vpop.f32.mrf.mxu0
    %v1424 = vadd.f32 %v1381, %v1423
    %v1425 = vpop.f32.mrf.mxu0
    %v1426 = vadd.f32 %v1383, %v1425
    %1427 = vdwg.mxu0
    %1428 = vmatprep.subr.bf16.mxu0 %v1103
    %1429 = vmatpush1.bf16.msra.mxu0 %v1102
    %1430 = vmatprep.subr.bf16.mxu0 %v1099
    %1431 = vmatpush1.bf16.msra.mxu0 %v1098
    %1432 = vmatprep.subr.bf16.mxu0 %v1095
    %1433 = vmatpush1.bf16.msra.mxu0 %v1094
    %1434 = vmatprep.subr.bf16.mxu0 %v1091
    %1435 = vmatpush1.bf16.msra.mxu0 %v1090
    %1436 = vmatprep.subr.bf16.mxu0 %v1087
    %1437 = vmatpush1.bf16.msra.mxu0 %v1086
    %1438 = vmatprep.subr.bf16.mxu0 %v1083
    %1439 = vmatpush1.bf16.msra.mxu0 %v1082
    %1440 = vmatprep.subr.bf16.mxu0 %v1079
    %1441 = vmatpush1.bf16.msra.mxu0 %v1078
    %1442 = vmatprep.subr.bf16.mxu0 %v1075
    %1443 = vmatpush1.bf16.msra.mxu0 %v1074
    %1444 = vmatprep.subr.bf16.mxu0 %v1135
    %1445 = vmatpush2.bf16.msra.mxu0 %v1134
    %1446 = vmatprep.subr.bf16.mxu0 %v1131
    %1447 = vmatpush2.bf16.msra.mxu0 %v1130
    %1448 = vmatprep.subr.bf16.mxu0 %v1127
    %1449 = vmatpush2.bf16.msra.mxu0 %v1126
    %1450 = vmatprep.subr.bf16.mxu0 %v1123
    %1451 = vmatpush2.bf16.msra.mxu0 %v1122
    %1452 = vmatprep.subr.bf16.mxu0 %v1119
    %1453 = vmatpush2.bf16.msra.mxu0 %v1118
    %1454 = vmatprep.subr.bf16.mxu0 %v1115
    %1455 = vmatpush2.bf16.msra.mxu0 %v1114
    %1456 = vmatprep.subr.bf16.mxu0 %v1111
    %1457 = vmatpush2.bf16.msra.mxu0 %v1110
    %1458 = vmatprep.subr.bf16.mxu0 %v1107
    %1459 = vmatpush2.bf16.msra.mxu0 %v1106
    %1460 = vmatprep.mubr.bf16.mxu0 %v350
    %1461 = vmatmul.mubr.bf16.gmra.mxu0 %v349
    %v1462 = vpop.f32.mrf.mxu0
    %v1463 = vadd.f32 %v1420, %v1462
    %v1464 = vpop.f32.mrf.mxu0
    %v1465 = vadd.f32 %v1422, %v1464
    %v1466 = vpop.f32.mrf.mxu0
    %v1467 = vadd.f32 %v1424, %v1466
    %v1468 = vpop.f32.mrf.mxu0
    %v1469 = vadd.f32 %v1426, %v1468
    %1470 = vdwg.mxu0
    %1471 = vmatprep.subr.bf16.mxu0 0
    %1472 = vmatpush1.bf16.msra.mxu0 0
    %1473 = vmatprep.subr.bf16.mxu0 0
    %1474 = vmatpush1.bf16.msra.mxu0 0
    %1475 = vmatprep.subr.bf16.mxu0 0
    %1476 = vmatpush1.bf16.msra.mxu0 0
    %1477 = vmatprep.subr.bf16.mxu0 0
    %1478 = vmatpush1.bf16.msra.mxu0 0
    %1479 = vmatprep.subr.bf16.mxu0 0
    %1480 = vmatpush1.bf16.msra.mxu0 0
    %1481 = vmatprep.subr.bf16.mxu0 0
    %1482 = vmatpush1.bf16.msra.mxu0 0
    %1483 = vmatprep.subr.bf16.mxu0 0
    %1484 = vmatpush1.bf16.msra.mxu0 0
    %1485 = vmatprep.subr.bf16.mxu0 %v1139
    %1486 = vmatpush1.bf16.msra.mxu0 %v1138
    %1487 = vmatprep.subr.bf16.mxu0 0
    %1488 = vmatpush2.bf16.msra.mxu0 0
    %1489 = vmatprep.subr.bf16.mxu0 0
    %1490 = vmatpush2.bf16.msra.mxu0 0
    %1491 = vmatprep.subr.bf16.mxu0 0
    %1492 = vmatpush2.bf16.msra.mxu0 0
    %1493 = vmatprep.subr.bf16.mxu0 0
    %1494 = vmatpush2.bf16.msra.mxu0 0
    %1495 = vmatprep.subr.bf16.mxu0 0
    %1496 = vmatpush2.bf16.msra.mxu0 0
    %1497 = vmatprep.subr.bf16.mxu0 0
    %1498 = vmatpush2.bf16.msra.mxu0 0
    %1499 = vmatprep.subr.bf16.mxu0 0
    %1500 = vmatpush2.bf16.msra.mxu0 0
    %1501 = vmatprep.subr.bf16.mxu0 0
    %1502 = vmatpush2.bf16.msra.mxu0 0
    %1503 = vmatprep.mubr.bf16.mxu0 0
    %1504 = vmatmul.mubr.bf16.gmra.mxu0 %v1340
    %v1505 = vpop.f32.mrf.mxu0
    %v1506 = vadd.f32 %v1463, %v1505
    %v1507 = vpop.f32.mrf.mxu0
    %v1508 = vadd.f32 %v1465, %v1507
    %v1509 = vpop.f32.mrf.mxu0
    %v1510 = vadd.f32 %v1467, %v1509
    %v1511 = vpop.f32.mrf.mxu0
    %v1512 = vadd.f32 %v1469, %v1511
    %1513 = vdwg.mxu0
    %1514 = vmatprep.subr.bf16.mxu0 %v977
    %1515 = vmatpush1.bf16.msra.mxu0 %v976
    %1516 = vmatprep.subr.bf16.mxu0 %v973
    %1517 = vmatpush1.bf16.msra.mxu0 %v972
    %1518 = vmatprep.subr.bf16.mxu0 %v969
    %1519 = vmatpush1.bf16.msra.mxu0 %v968
    %1520 = vmatprep.subr.bf16.mxu0 %v965
    %1521 = vmatpush1.bf16.msra.mxu0 %v964
    %1522 = vmatprep.subr.bf16.mxu0 %v961
    %1523 = vmatpush1.bf16.msra.mxu0 %v960
    %1524 = vmatprep.subr.bf16.mxu0 %v957
    %1525 = vmatpush1.bf16.msra.mxu0 %v956
    %1526 = vmatprep.subr.bf16.mxu0 %v953
    %1527 = vmatpush1.bf16.msra.mxu0 %v952
    %1528 = vmatprep.subr.bf16.mxu0 %v949
    %1529 = vmatpush1.bf16.msra.mxu0 %v948
    %1530 = vmatprep.subr.bf16.mxu0 %v1009
    %1531 = vmatpush2.bf16.msra.mxu0 %v1008
    %1532 = vmatprep.subr.bf16.mxu0 %v1005
    %1533 = vmatpush2.bf16.msra.mxu0 %v1004
    %1534 = vmatprep.subr.bf16.mxu0 %v1001
    %1535 = vmatpush2.bf16.msra.mxu0 %v1000
    %1536 = vmatprep.subr.bf16.mxu0 %v997
    %1537 = vmatpush2.bf16.msra.mxu0 %v996
    %1538 = vmatprep.subr.bf16.mxu0 %v993
    %1539 = vmatpush2.bf16.msra.mxu0 %v992
    %1540 = vmatprep.subr.bf16.mxu0 %v989
    %1541 = vmatpush2.bf16.msra.mxu0 %v988
    %1542 = vmatprep.subr.bf16.mxu0 %v985
    %1543 = vmatpush2.bf16.msra.mxu0 %v984
    %1544 = vmatprep.subr.bf16.mxu0 %v981
    %1545 = vmatpush2.bf16.msra.mxu0 %v980
    %1546 = vmatprep.mubr.bf16.mxu0 %v346
    %1547 = vmatmul.mubr.bf16.gmra.mxu0 %v345
    %v1548 = vpop.f32.mrf.mxu0
    %v1549 = vadd.f32 %v314, %v1548
    %v1550 = vpop.f32.mrf.mxu0
    %v1551 = vadd.f32 %v318, %v1550
    %v1552 = vpop.f32.mrf.mxu0
    %v1553 = vadd.f32 %v314, %v1552
    %v1554 = vpop.f32.mrf.mxu0
    %v1555 = vadd.f32 %v318, %v1554
    %1556 = vdwg.mxu0
    %1557 = vmatprep.subr.bf16.mxu0 %v1041
    %1558 = vmatpush1.bf16.msra.mxu0 %v1040
    %1559 = vmatprep.subr.bf16.mxu0 %v1037
    %1560 = vmatpush1.bf16.msra.mxu0 %v1036
    %1561 = vmatprep.subr.bf16.mxu0 %v1033
    %1562 = vmatpush1.bf16.msra.mxu0 %v1032
    %1563 = vmatprep.subr.bf16.mxu0 %v1029
    %1564 = vmatpush1.bf16.msra.mxu0 %v1028
    %1565 = vmatprep.subr.bf16.mxu0 %v1025
    %1566 = vmatpush1.bf16.msra.mxu0 %v1024
    %1567 = vmatprep.subr.bf16.mxu0 %v1021
    %1568 = vmatpush1.bf16.msra.mxu0 %v1020
    %1569 = vmatprep.subr.bf16.mxu0 %v1017
    %1570 = vmatpush1.bf16.msra.mxu0 %v1016
    %1571 = vmatprep.subr.bf16.mxu0 %v1013
    %1572 = vmatpush1.bf16.msra.mxu0 %v1012
    %1573 = vmatprep.subr.bf16.mxu0 %v1073
    %1574 = vmatpush2.bf16.msra.mxu0 %v1072
    %1575 = vmatprep.subr.bf16.mxu0 %v1069
    %1576 = vmatpush2.bf16.msra.mxu0 %v1068
    %1577 = vmatprep.subr.bf16.mxu0 %v1065
    %1578 = vmatpush2.bf16.msra.mxu0 %v1064
    %1579 = vmatprep.subr.bf16.mxu0 %v1061
    %1580 = vmatpush2.bf16.msra.mxu0 %v1060
    %1581 = vmatprep.subr.bf16.mxu0 %v1057
    %1582 = vmatpush2.bf16.msra.mxu0 %v1056
    %1583 = vmatprep.subr.bf16.mxu0 %v1053
    %1584 = vmatpush2.bf16.msra.mxu0 %v1052
    %1585 = vmatprep.subr.bf16.mxu0 %v1049
    %1586 = vmatpush2.bf16.msra.mxu0 %v1048
    %1587 = vmatprep.subr.bf16.mxu0 %v1045
    %1588 = vmatpush2.bf16.msra.mxu0 %v1044
    %1589 = vmatprep.mubr.bf16.mxu0 %v348
    %1590 = vmatmul.mubr.bf16.gmra.mxu0 %v347
    %v1591 = vpop.f32.mrf.mxu0
    %v1592 = vadd.f32 %v1549, %v1591
    %v1593 = vpop.f32.mrf.mxu0
    %v1594 = vadd.f32 %v1551, %v1593
    %v1595 = vpop.f32.mrf.mxu0
    %v1596 = vadd.f32 %v1553, %v1595
    %v1597 = vpop.f32.mrf.mxu0
    %v1598 = vadd.f32 %v1555, %v1597
    %1599 = vdwg.mxu0
    %1600 = vmatprep.subr.bf16.mxu0 %v1105
    %1601 = vmatpush1.bf16.msra.mxu0 %v1104
    %1602 = vmatprep.subr.bf16.mxu0 %v1101
    %1603 = vmatpush1.bf16.msra.mxu0 %v1100
    %1604 = vmatprep.subr.bf16.mxu0 %v1097
    %1605 = vmatpush1.bf16.msra.mxu0 %v1096
    %1606 = vmatprep.subr.bf16.mxu0 %v1093
    %1607 = vmatpush1.bf16.msra.mxu0 %v1092
    %1608 = vmatprep.subr.bf16.mxu0 %v1089
    %1609 = vmatpush1.bf16.msra.mxu0 %v1088
    %1610 = vmatprep.subr.bf16.mxu0 %v1085
    %1611 = vmatpush1.bf16.msra.mxu0 %v1084
    %1612 = vmatprep.subr.bf16.mxu0 %v1081
    %1613 = vmatpush1.bf16.msra.mxu0 %v1080
    %1614 = vmatprep.subr.bf16.mxu0 %v1077
    %1615 = vmatpush1.bf16.msra.mxu0 %v1076
    %1616 = vmatprep.subr.bf16.mxu0 %v1137
    %1617 = vmatpush2.bf16.msra.mxu0 %v1136
    %1618 = vmatprep.subr.bf16.mxu0 %v1133
    %1619 = vmatpush2.bf16.msra.mxu0 %v1132
    %1620 = vmatprep.subr.bf16.mxu0 %v1129
    %1621 = vmatpush2.bf16.msra.mxu0 %v1128
    %1622 = vmatprep.subr.bf16.mxu0 %v1125
    %1623 = vmatpush2.bf16.msra.mxu0 %v1124
    %1624 = vmatprep.subr.bf16.mxu0 %v1121
    %1625 = vmatpush2.bf16.msra.mxu0 %v1120
    %1626 = vmatprep.subr.bf16.mxu0 %v1117
    %1627 = vmatpush2.bf16.msra.mxu0 %v1116
    %1628 = vmatprep.subr.bf16.mxu0 %v1113
    %1629 = vmatpush2.bf16.msra.mxu0 %v1112
    %1630 = vmatprep.subr.bf16.mxu0 %v1109
    %1631 = vmatpush2.bf16.msra.mxu0 %v1108
    %1632 = vmatprep.mubr.bf16.mxu0 %v350
    %1633 = vmatmul.mubr.bf16.gmra.mxu0 %v349
    %v1634 = vpop.f32.mrf.mxu0
    %v1635 = vadd.f32 %v1592, %v1634
    %v1636 = vpop.f32.mrf.mxu0
    %v1637 = vadd.f32 %v1594, %v1636
    %v1638 = vpop.f32.mrf.mxu0
    %v1639 = vadd.f32 %v1596, %v1638
    %v1640 = vpop.f32.mrf.mxu0
    %v1641 = vadd.f32 %v1598, %v1640
    %1642 = vdwg.mxu0
    %1643 = vmatprep.subr.bf16.mxu0 0
    %1644 = vmatpush1.bf16.msra.mxu0 0
    %1645 = vmatprep.subr.bf16.mxu0 0
    %1646 = vmatpush1.bf16.msra.mxu0 0
    %1647 = vmatprep.subr.bf16.mxu0 0
    %1648 = vmatpush1.bf16.msra.mxu0 0
    %1649 = vmatprep.subr.bf16.mxu0 0
    %1650 = vmatpush1.bf16.msra.mxu0 0
    %1651 = vmatprep.subr.bf16.mxu0 0
    %1652 = vmatpush1.bf16.msra.mxu0 0
    %1653 = vmatprep.subr.bf16.mxu0 0
    %1654 = vmatpush1.bf16.msra.mxu0 0
    %1655 = vmatprep.subr.bf16.mxu0 0
    %1656 = vmatpush1.bf16.msra.mxu0 0
    %1657 = vmatprep.subr.bf16.mxu0 %v1141
    %1658 = vmatpush1.bf16.msra.mxu0 %v1140
    %1659 = vmatprep.subr.bf16.mxu0 0
    %1660 = vmatpush2.bf16.msra.mxu0 0
    %1661 = vmatprep.subr.bf16.mxu0 0
    %1662 = vmatpush2.bf16.msra.mxu0 0
    %1663 = vmatprep.subr.bf16.mxu0 0
    %1664 = vmatpush2.bf16.msra.mxu0 0
    %1665 = vmatprep.subr.bf16.mxu0 0
    %1666 = vmatpush2.bf16.msra.mxu0 0
    %1667 = vmatprep.subr.bf16.mxu0 0
    %1668 = vmatpush2.bf16.msra.mxu0 0
    %1669 = vmatprep.subr.bf16.mxu0 0
    %1670 = vmatpush2.bf16.msra.mxu0 0
    %1671 = vmatprep.subr.bf16.mxu0 0
    %1672 = vmatpush2.bf16.msra.mxu0 0
    %1673 = vmatprep.subr.bf16.mxu0 0
    %1674 = vmatpush2.bf16.msra.mxu0 0
    %1675 = vmatprep.mubr.bf16.mxu0 0
    %1676 = vmatmul.mubr.bf16.gmra.mxu0 %v1340
    %v1677 = vpop.f32.mrf.mxu0
    %v1678 = vadd.f32 %v1635, %v1677
    %v1679 = vpop.f32.mrf.mxu0
    %v1680 = vadd.f32 %v1637, %v1679
    %v1681 = vpop.f32.mrf.mxu0
    %v1682 = vadd.f32 %v1639, %v1681
    %v1683 = vpop.f32.mrf.mxu0
    %v1684 = vadd.f32 %v1641, %v1683
    %1685 = vdwg.mxu0
    %v1686 = vmax.f32 %v1506, 0.0
    %v1687 = vmax.f32 %v1508, 0.0
    %v1688 = vmax.f32 %v1678, 0.0
    %v1689 = vmax.f32 %v1680, 0.0
    %v1690 = vmax.f32 %v1510, 0.0
    %v1691 = vmax.f32 %v1512, 0.0
    %v1692 = vmax.f32 %v1682, 0.0
    %v1693 = vmax.f32 %v1684, 0.0
    %v1694 = vpack.c.bf16 %v1690, %v1686
    %v1695 = vpack.c.bf16 %v1691, %v1687
    %v1696 = vpack.c.bf16 %v1692, %v1688
    %v1697 = vpack.c.bf16 %v1693, %v1689
    %v1698 = vld [vmem:[#allocation8] sm:$0xff]
    %v1699 = vld [vmem:[#allocation8 + $0x8] sm:$0xff]
    %v1700 = vld [vmem:[#allocation8 + $0x10] sm:$0xff]
    %v1701 = vld [vmem:[#allocation8 + $0x18] sm:$0xff]
    %v1702 = vld [vmem:[#allocation8 + $0x20] sm:$0xff]
    %v1703 = vld [vmem:[#allocation8 + $0x28] sm:$0xff]
    %v1704 = vld [vmem:[#allocation8 + $0x30] sm:$0xff]
    %v1705 = vld [vmem:[#allocation8 + $0x38] sm:$0xff]
    %v1706 = vld [vmem:[#allocation8 + $0x40] sm:$0xff]
    %v1707 = vld [vmem:[#allocation8 + $0x48] sm:$0xff]
    %v1708 = vld [vmem:[#allocation8 + $0x50] sm:$0xff]
    %v1709 = vld [vmem:[#allocation8 + $0x58] sm:$0xff]
    %v1710 = vld [vmem:[#allocation8 + $0x60] sm:$0xff]
    %v1711 = vld [vmem:[#allocation8 + $0x68] sm:$0xff]
    %v1712 = vld [vmem:[#allocation8 + $0x70] sm:$0xff]
    %v1713 = vld [vmem:[#allocation8 + $0x78] sm:$0xff]
    %v1714 = vld [vmem:[#allocation8 + $0x80] sm:$0xff]
    %v1715 = vld [vmem:[#allocation8 + $0x88] sm:$0xff]
    %v1716 = vld [vmem:[#allocation8 + $0x90] sm:$0xff]
    %v1717 = vld [vmem:[#allocation8 + $0x98] sm:$0xff]
    %v1718 = vld [vmem:[#allocation8 + $0xa0] sm:$0xff]
    %v1719 = vld [vmem:[#allocation8 + $0xa8] sm:$0xff]
    %v1720 = vld [vmem:[#allocation8 + $0xb0] sm:$0xff]
    %v1721 = vld [vmem:[#allocation8 + $0xb8] sm:$0xff]
    %v1722 = vld [vmem:[#allocation8 + $0xc0] sm:$0xff]
    %v1723 = vld [vmem:[#allocation8 + $0xc8] sm:$0xff]
    %v1724 = vld [vmem:[#allocation8 + $0xd0] sm:$0xff]
    %v1725 = vld [vmem:[#allocation8 + $0xd8] sm:$0xff]
    %v1726 = vld [vmem:[#allocation8 + $0xe0] sm:$0xff]
    %v1727 = vld [vmem:[#allocation8 + $0xe8] sm:$0xff]
    %v1728 = vld [vmem:[#allocation8 + $0xf0] sm:$0xff]
    %v1729 = vld [vmem:[#allocation8 + $0xf8] sm:$0xff]
    %v1730 = vld [vmem:[#allocation8 + $0x100] sm:$0xff]
    %v1731 = vld [vmem:[#allocation8 + $0x108] sm:$0xff]
    %v1732 = vld [vmem:[#allocation8 + $0x110] sm:$0xff]
    %v1733 = vld [vmem:[#allocation8 + $0x118] sm:$0xff]
    %v1734 = vld [vmem:[#allocation8 + $0x120] sm:$0xff]
    %v1735 = vld [vmem:[#allocation8 + $0x128] sm:$0xff]
    %v1736 = vld [vmem:[#allocation8 + $0x130] sm:$0xff]
    %v1737 = vld [vmem:[#allocation8 + $0x138] sm:$0xff]
    %v1738 = vld [vmem:[#allocation8 + $0x140] sm:$0xff]
    %v1739 = vld [vmem:[#allocation8 + $0x148] sm:$0xff]
    %v1740 = vld [vmem:[#allocation8 + $0x150] sm:$0xff]
    %v1741 = vld [vmem:[#allocation8 + $0x158] sm:$0xff]
    %v1742 = vld [vmem:[#allocation8 + $0x160] sm:$0xff]
    %v1743 = vld [vmem:[#allocation8 + $0x168] sm:$0xff]
    %v1744 = vld [vmem:[#allocation8 + $0x170] sm:$0xff]
    %v1745 = vld [vmem:[#allocation8 + $0x178] sm:$0xff]
    %v1746 = vld [vmem:[#allocation8 + $0x180] sm:$0xff]
    %v1747 = vld [vmem:[#allocation8 + $0x188] sm:$0xff]
    %v1748 = vld [vmem:[#allocation8 + $0x190] sm:$0xff]
    %v1749 = vld [vmem:[#allocation8 + $0x198] sm:$0xff]
    %v1750 = vld [vmem:[#allocation8 + $0x1a0] sm:$0xff]
    %v1751 = vld [vmem:[#allocation8 + $0x1a8] sm:$0xff]
    %v1752 = vld [vmem:[#allocation8 + $0x1b0] sm:$0xff]
    %v1753 = vld [vmem:[#allocation8 + $0x1b8] sm:$0xff]
    %v1754 = vld [vmem:[#allocation8 + $0x1c0] sm:$0xff]
    %v1755 = vld [vmem:[#allocation8 + $0x1c8] sm:$0xff]
    %v1756 = vld [vmem:[#allocation8 + $0x1d0] sm:$0xff]
    %v1757 = vld [vmem:[#allocation8 + $0x1d8] sm:$0xff]
    %v1758 = vld [vmem:[#allocation8 + $0x1e0] sm:$0xff]
    %v1759 = vld [vmem:[#allocation8 + $0x1e8] sm:$0xff]
    %v1760 = vld [vmem:[#allocation8 + $0x1f0] sm:$0xff]
    %v1761 = vld [vmem:[#allocation8 + $0x1f8] sm:$0xff]
    %v1762 = vld [vmem:[%s4] sm:$0x3]
    %v1764 = vlaneseq
    %v1765 = vshrl.u32 %v1764, 7
    %v1766 = vsub.s32 0, %v1765
    %v1767 = vrot.slane %v1762, %v1766
    %v1768 = vlaneseq
    %v1769 = vshrl.u32 %v1768, 7
    %v1770 = vsub.s32 1, %v1769
    %v1771 = vrot.slane %v1762, %v1770
    %v1838 = vunpack.c.l.b16 %v1698
    %v1839 = vunpack.c.h.b16 %v1698
    %v1840 = vunpack.c.l.b16 %v1699
    %v1841 = vunpack.c.h.b16 %v1699
    %v1842 = vunpack.c.l.b16 %v1700
    %v1843 = vunpack.c.h.b16 %v1700
    %v1844 = vunpack.c.l.b16 %v1701
    %v1845 = vunpack.c.h.b16 %v1701
    %v1846 = vunpack.c.l.b16 %v1702
    %v1847 = vunpack.c.h.b16 %v1702
    %v1848 = vunpack.c.l.b16 %v1703
    %v1849 = vunpack.c.h.b16 %v1703
    %v1850 = vunpack.c.l.b16 %v1704
    %v1851 = vunpack.c.h.b16 %v1704
    %v1852 = vunpack.c.l.b16 %v1705
    %v1853 = vunpack.c.h.b16 %v1705
    %v1854 = vunpack.c.l.b16 %v1706
    %v1855 = vunpack.c.h.b16 %v1706
    %v1856 = vunpack.c.l.b16 %v1707
    %v1857 = vunpack.c.h.b16 %v1707
    %v1858 = vunpack.c.l.b16 %v1708
    %v1859 = vunpack.c.h.b16 %v1708
    %v1860 = vunpack.c.l.b16 %v1709
    %v1861 = vunpack.c.h.b16 %v1709
    %v1862 = vunpack.c.l.b16 %v1710
    %v1863 = vunpack.c.h.b16 %v1710
    %v1864 = vunpack.c.l.b16 %v1711
    %v1865 = vunpack.c.h.b16 %v1711
    %v1866 = vunpack.c.l.b16 %v1712
    %v1867 = vunpack.c.h.b16 %v1712
    %v1868 = vunpack.c.l.b16 %v1713
    %v1869 = vunpack.c.h.b16 %v1713
    %v1870 = vunpack.c.l.b16 %v1714
    %v1871 = vunpack.c.h.b16 %v1714
    %v1872 = vunpack.c.l.b16 %v1715
    %v1873 = vunpack.c.h.b16 %v1715
    %v1874 = vunpack.c.l.b16 %v1716
    %v1875 = vunpack.c.h.b16 %v1716
    %v1876 = vunpack.c.l.b16 %v1717
    %v1877 = vunpack.c.h.b16 %v1717
    %v1878 = vunpack.c.l.b16 %v1718
    %v1879 = vunpack.c.h.b16 %v1718
    %v1880 = vunpack.c.l.b16 %v1719
    %v1881 = vunpack.c.h.b16 %v1719
    %v1882 = vunpack.c.l.b16 %v1720
    %v1883 = vunpack.c.h.b16 %v1720
    %v1884 = vunpack.c.l.b16 %v1721
    %v1885 = vunpack.c.h.b16 %v1721
    %v1886 = vunpack.c.l.b16 %v1722
    %v1887 = vunpack.c.h.b16 %v1722
    %v1888 = vunpack.c.l.b16 %v1723
    %v1889 = vunpack.c.h.b16 %v1723
    %v1890 = vunpack.c.l.b16 %v1724
    %v1891 = vunpack.c.h.b16 %v1724
    %v1892 = vunpack.c.l.b16 %v1725
    %v1893 = vunpack.c.h.b16 %v1725
    %v1894 = vunpack.c.l.b16 %v1726
    %v1895 = vunpack.c.h.b16 %v1726
    %v1896 = vunpack.c.l.b16 %v1727
    %v1897 = vunpack.c.h.b16 %v1727
    %v1898 = vunpack.c.l.b16 %v1728
    %v1899 = vunpack.c.h.b16 %v1728
    %v1900 = vunpack.c.l.b16 %v1729
    %v1901 = vunpack.c.h.b16 %v1729
    %v1902 = vunpack.c.l.b16 %v1730
    %v1903 = vunpack.c.h.b16 %v1730
    %v1904 = vunpack.c.l.b16 %v1731
    %v1905 = vunpack.c.h.b16 %v1731
    %v1906 = vunpack.c.l.b16 %v1732
    %v1907 = vunpack.c.h.b16 %v1732
    %v1908 = vunpack.c.l.b16 %v1733
    %v1909 = vunpack.c.h.b16 %v1733
    %v1910 = vunpack.c.l.b16 %v1734
    %v1911 = vunpack.c.h.b16 %v1734
    %v1912 = vunpack.c.l.b16 %v1735
    %v1913 = vunpack.c.h.b16 %v1735
    %v1914 = vunpack.c.l.b16 %v1736
    %v1915 = vunpack.c.h.b16 %v1736
    %v1916 = vunpack.c.l.b16 %v1737
    %v1917 = vunpack.c.h.b16 %v1737
    %v1918 = vunpack.c.l.b16 %v1738
    %v1919 = vunpack.c.h.b16 %v1738
    %v1920 = vunpack.c.l.b16 %v1739
    %v1921 = vunpack.c.h.b16 %v1739
    %v1922 = vunpack.c.l.b16 %v1740
    %v1923 = vunpack.c.h.b16 %v1740
    %v1924 = vunpack.c.l.b16 %v1741
    %v1925 = vunpack.c.h.b16 %v1741
    %v1926 = vunpack.c.l.b16 %v1742
    %v1927 = vunpack.c.h.b16 %v1742
    %v1928 = vunpack.c.l.b16 %v1743
    %v1929 = vunpack.c.h.b16 %v1743
    %v1930 = vunpack.c.l.b16 %v1744
    %v1931 = vunpack.c.h.b16 %v1744
    %v1932 = vunpack.c.l.b16 %v1745
    %v1933 = vunpack.c.h.b16 %v1745
    %v1934 = vunpack.c.l.b16 %v1746
    %v1935 = vunpack.c.h.b16 %v1746
    %v1936 = vunpack.c.l.b16 %v1747
    %v1937 = vunpack.c.h.b16 %v1747
    %v1938 = vunpack.c.l.b16 %v1748
    %v1939 = vunpack.c.h.b16 %v1748
    %v1940 = vunpack.c.l.b16 %v1749
    %v1941 = vunpack.c.h.b16 %v1749
    %v1942 = vunpack.c.l.b16 %v1750
    %v1943 = vunpack.c.h.b16 %v1750
    %v1944 = vunpack.c.l.b16 %v1751
    %v1945 = vunpack.c.h.b16 %v1751
    %v1946 = vunpack.c.l.b16 %v1752
    %v1947 = vunpack.c.h.b16 %v1752
    %v1948 = vunpack.c.l.b16 %v1753
    %v1949 = vunpack.c.h.b16 %v1753
    %v1950 = vunpack.c.l.b16 %v1754
    %v1951 = vunpack.c.h.b16 %v1754
    %v1952 = vunpack.c.l.b16 %v1755
    %v1953 = vunpack.c.h.b16 %v1755
    %v1954 = vunpack.c.l.b16 %v1756
    %v1955 = vunpack.c.h.b16 %v1756
    %v1956 = vunpack.c.l.b16 %v1757
    %v1957 = vunpack.c.h.b16 %v1757
    %v1958 = vunpack.c.l.b16 %v1758
    %v1959 = vunpack.c.h.b16 %v1758
    %v1960 = vunpack.c.l.b16 %v1759
    %v1961 = vunpack.c.h.b16 %v1759
    %v1962 = vunpack.c.l.b16 %v1760
    %v1963 = vunpack.c.h.b16 %v1760
    %v1964 = vunpack.c.l.b16 %v1761
    %v1965 = vunpack.c.h.b16 %v1761
    %v1966 = vpack.c.b16 %v1840, %v1838
    %v1967 = vpack.c.b16 %v1841, %v1839
    %v1968 = vpack.c.b16 %v1844, %v1842
    %v1969 = vpack.c.b16 %v1845, %v1843
    %v1970 = vpack.c.b16 %v1848, %v1846
    %v1971 = vpack.c.b16 %v1849, %v1847
    %v1972 = vpack.c.b16 %v1852, %v1850
    %v1973 = vpack.c.b16 %v1853, %v1851
    %v1974 = vpack.c.b16 %v1856, %v1854
    %v1975 = vpack.c.b16 %v1857, %v1855
    %v1976 = vpack.c.b16 %v1860, %v1858
    %v1977 = vpack.c.b16 %v1861, %v1859
    %v1978 = vpack.c.b16 %v1864, %v1862
    %v1979 = vpack.c.b16 %v1865, %v1863
    %v1980 = vpack.c.b16 %v1868, %v1866
    %v1981 = vpack.c.b16 %v1869, %v1867
    %v1982 = vpack.c.b16 %v1872, %v1870
    %v1983 = vpack.c.b16 %v1873, %v1871
    %v1984 = vpack.c.b16 %v1876, %v1874
    %v1985 = vpack.c.b16 %v1877, %v1875
    %v1986 = vpack.c.b16 %v1880, %v1878
    %v1987 = vpack.c.b16 %v1881, %v1879
    %v1988 = vpack.c.b16 %v1884, %v1882
    %v1989 = vpack.c.b16 %v1885, %v1883
    %v1990 = vpack.c.b16 %v1888, %v1886
    %v1991 = vpack.c.b16 %v1889, %v1887
    %v1992 = vpack.c.b16 %v1892, %v1890
    %v1993 = vpack.c.b16 %v1893, %v1891
    %v1994 = vpack.c.b16 %v1896, %v1894
    %v1995 = vpack.c.b16 %v1897, %v1895
    %v1996 = vpack.c.b16 %v1900, %v1898
    %v1997 = vpack.c.b16 %v1901, %v1899
    %v1998 = vpack.c.b16 %v1904, %v1902
    %v1999 = vpack.c.b16 %v1905, %v1903
    %v2000 = vpack.c.b16 %v1908, %v1906
    %v2001 = vpack.c.b16 %v1909, %v1907
    %v2002 = vpack.c.b16 %v1912, %v1910
    %v2003 = vpack.c.b16 %v1913, %v1911
    %v2004 = vpack.c.b16 %v1916, %v1914
    %v2005 = vpack.c.b16 %v1917, %v1915
    %v2006 = vpack.c.b16 %v1920, %v1918
    %v2007 = vpack.c.b16 %v1921, %v1919
    %v2008 = vpack.c.b16 %v1924, %v1922
    %v2009 = vpack.c.b16 %v1925, %v1923
    %v2010 = vpack.c.b16 %v1928, %v1926
    %v2011 = vpack.c.b16 %v1929, %v1927
    %v2012 = vpack.c.b16 %v1932, %v1930
    %v2013 = vpack.c.b16 %v1933, %v1931
    %v2014 = vpack.c.b16 %v1936, %v1934
    %v2015 = vpack.c.b16 %v1937, %v1935
    %v2016 = vpack.c.b16 %v1940, %v1938
    %v2017 = vpack.c.b16 %v1941, %v1939
    %v2018 = vpack.c.b16 %v1944, %v1942
    %v2019 = vpack.c.b16 %v1945, %v1943
    %v2020 = vpack.c.b16 %v1948, %v1946
    %v2021 = vpack.c.b16 %v1949, %v1947
    %v2022 = vpack.c.b16 %v1952, %v1950
    %v2023 = vpack.c.b16 %v1953, %v1951
    %v2024 = vpack.c.b16 %v1956, %v1954
    %v2025 = vpack.c.b16 %v1957, %v1955
    %v2026 = vpack.c.b16 %v1960, %v1958
    %v2027 = vpack.c.b16 %v1961, %v1959
    %v2028 = vpack.c.b16 %v1964, %v1962
    %v2029 = vpack.c.b16 %v1965, %v1963
    %2094 = vmatprep.subr.bf16.mxu0 %v1981
    %2095 = vmatpush1.bf16.msra.mxu0 %v1980
    %2096 = vmatprep.subr.bf16.mxu0 %v1979
    %2097 = vmatpush1.bf16.msra.mxu0 %v1978
    %2098 = vmatprep.subr.bf16.mxu0 %v1977
    %2099 = vmatpush1.bf16.msra.mxu0 %v1976
    %2100 = vmatprep.subr.bf16.mxu0 %v1975
    %2101 = vmatpush1.bf16.msra.mxu0 %v1974
    %2102 = vmatprep.subr.bf16.mxu0 %v1973
    %2103 = vmatpush1.bf16.msra.mxu0 %v1972
    %2104 = vmatprep.subr.bf16.mxu0 %v1971
    %2105 = vmatpush1.bf16.msra.mxu0 %v1970
    %2106 = vmatprep.subr.bf16.mxu0 %v1969
    %2107 = vmatpush1.bf16.msra.mxu0 %v1968
    %2108 = vmatprep.subr.bf16.mxu0 %v1967
    %2109 = vmatpush1.bf16.msra.mxu0 %v1966
    %2110 = vmatprep.subr.bf16.mxu0 %v1997
    %2111 = vmatpush2.bf16.msra.mxu0 %v1996
    %2112 = vmatprep.subr.bf16.mxu0 %v1995
    %2113 = vmatpush2.bf16.msra.mxu0 %v1994
    %2114 = vmatprep.subr.bf16.mxu0 %v1993
    %2115 = vmatpush2.bf16.msra.mxu0 %v1992
    %2116 = vmatprep.subr.bf16.mxu0 %v1991
    %2117 = vmatpush2.bf16.msra.mxu0 %v1990
    %2118 = vmatprep.subr.bf16.mxu0 %v1989
    %2119 = vmatpush2.bf16.msra.mxu0 %v1988
    %2120 = vmatprep.subr.bf16.mxu0 %v1987
    %2121 = vmatpush2.bf16.msra.mxu0 %v1986
    %2122 = vmatprep.subr.bf16.mxu0 %v1985
    %2123 = vmatpush2.bf16.msra.mxu0 %v1984
    %2124 = vmatprep.subr.bf16.mxu0 %v1983
    %2125 = vmatpush2.bf16.msra.mxu0 %v1982
    %2126 = vmatprep.mubr.bf16.mxu0 %v1695
    %2127 = vmatmul.mubr.bf16.gmra.mxu0 %v1694
    %v2128 = vpop.f32.mrf.mxu0
    %v2129 = vadd.f32 %v1767, %v2128
    %v2130 = vpop.f32.mrf.mxu0
    %v2131 = vadd.f32 %v1771, %v2130
    %v2132 = vpop.f32.mrf.mxu0
    %v2133 = vadd.f32 %v1767, %v2132
    %v2134 = vpop.f32.mrf.mxu0
    %v2135 = vadd.f32 %v1771, %v2134
    %2136 = vdwg.mxu0
    %2137 = vmatprep.subr.bf16.mxu0 %v2013
    %2138 = vmatpush1.bf16.msra.mxu0 %v2012
    %2139 = vmatprep.subr.bf16.mxu0 %v2011
    %2140 = vmatpush1.bf16.msra.mxu0 %v2010
    %2141 = vmatprep.subr.bf16.mxu0 %v2009
    %2142 = vmatpush1.bf16.msra.mxu0 %v2008
    %2143 = vmatprep.subr.bf16.mxu0 %v2007
    %2144 = vmatpush1.bf16.msra.mxu0 %v2006
    %2145 = vmatprep.subr.bf16.mxu0 %v2005
    %2146 = vmatpush1.bf16.msra.mxu0 %v2004
    %2147 = vmatprep.subr.bf16.mxu0 %v2003
    %2148 = vmatpush1.bf16.msra.mxu0 %v2002
    %2149 = vmatprep.subr.bf16.mxu0 %v2001
    %2150 = vmatpush1.bf16.msra.mxu0 %v2000
    %2151 = vmatprep.subr.bf16.mxu0 %v1999
    %2152 = vmatpush1.bf16.msra.mxu0 %v1998
    %2153 = vmatprep.subr.bf16.mxu0 %v2029
    %2154 = vmatpush2.bf16.msra.mxu0 %v2028
    %2155 = vmatprep.subr.bf16.mxu0 %v2027
    %2156 = vmatpush2.bf16.msra.mxu0 %v2026
    %2157 = vmatprep.subr.bf16.mxu0 %v2025
    %2158 = vmatpush2.bf16.msra.mxu0 %v2024
    %2159 = vmatprep.subr.bf16.mxu0 %v2023
    %2160 = vmatpush2.bf16.msra.mxu0 %v2022
    %2161 = vmatprep.subr.bf16.mxu0 %v2021
    %2162 = vmatpush2.bf16.msra.mxu0 %v2020
    %2163 = vmatprep.subr.bf16.mxu0 %v2019
    %2164 = vmatpush2.bf16.msra.mxu0 %v2018
    %2165 = vmatprep.subr.bf16.mxu0 %v2017
    %2166 = vmatpush2.bf16.msra.mxu0 %v2016
    %2167 = vmatprep.subr.bf16.mxu0 %v2015
    %2168 = vmatpush2.bf16.msra.mxu0 %v2014
    %2169 = vmatprep.mubr.bf16.mxu0 %v1697
    %2170 = vmatmul.mubr.bf16.gmra.mxu0 %v1696
    %v2171 = vpop.f32.mrf.mxu0
    %v2172 = vadd.f32 %v2129, %v2171
    %v2173 = vpop.f32.mrf.mxu0
    %v2174 = vadd.f32 %v2131, %v2173
    %v2175 = vpop.f32.mrf.mxu0
    %v2176 = vadd.f32 %v2133, %v2175
    %v2177 = vpop.f32.mrf.mxu0
    %v2178 = vadd.f32 %v2135, %v2177
    %2179 = vdwg.mxu0
    %v2180 = vmax.f32 %v2172, 0.0
    %v2181 = vmax.f32 %v2174, 0.0
    %v2182 = vmax.f32 %v2176, 0.0
    %v2183 = vmax.f32 %v2178, 0.0
    %v2184 = vpack.c.bf16 %v2182, %v2180
    %v2185 = vpack.c.bf16 %v2183, %v2181
    %v2186 = vld [vmem:[#allocation10] sm:$0xf]
    %v2187 = vld [vmem:[#allocation10 + $0x4] sm:$0xf]
    %v2188 = vld [vmem:[#allocation10 + $0x8] sm:$0xf]
    %v2189 = vld [vmem:[#allocation10 + $0xc] sm:$0xf]
    %v2190 = vld [vmem:[#allocation10 + $0x10] sm:$0xf]
    %v2191 = vld [vmem:[#allocation10 + $0x14] sm:$0xf]
    %v2192 = vld [vmem:[#allocation10 + $0x18] sm:$0xf]
    %v2193 = vld [vmem:[#allocation10 + $0x1c] sm:$0xf]
    %v2194 = vld [vmem:[#allocation10 + $0x20] sm:$0xf]
    %v2195 = vld [vmem:[#allocation10 + $0x24] sm:$0xf]
    %v2196 = vld [vmem:[#allocation10 + $0x28] sm:$0xf]
    %v2197 = vld [vmem:[#allocation10 + $0x2c] sm:$0xf]
    %v2198 = vld [vmem:[#allocation10 + $0x30] sm:$0xf]
    %v2199 = vld [vmem:[#allocation10 + $0x34] sm:$0xf]
    %v2200 = vld [vmem:[#allocation10 + $0x38] sm:$0xf]
    %v2201 = vld [vmem:[#allocation10 + $0x3c] sm:$0xf]
    %v2202 = vld [vmem:[#allocation10 + $0x40] sm:$0xf]
    %v2203 = vld [vmem:[#allocation10 + $0x44] sm:$0xf]
    %v2204 = vld [vmem:[#allocation10 + $0x48] sm:$0xf]
    %v2205 = vld [vmem:[#allocation10 + $0x4c] sm:$0xf]
    %v2206 = vld [vmem:[#allocation10 + $0x50] sm:$0xf]
    %v2207 = vld [vmem:[#allocation10 + $0x54] sm:$0xf]
    %v2208 = vld [vmem:[#allocation10 + $0x58] sm:$0xf]
    %v2209 = vld [vmem:[#allocation10 + $0x5c] sm:$0xf]
    %v2210 = vld [vmem:[#allocation10 + $0x60] sm:$0xf]
    %v2211 = vld [vmem:[#allocation10 + $0x64] sm:$0xf]
    %v2212 = vld [vmem:[#allocation10 + $0x68] sm:$0xf]
    %v2213 = vld [vmem:[#allocation10 + $0x6c] sm:$0xf]
    %v2214 = vld [vmem:[#allocation10 + $0x70] sm:$0xf]
    %v2215 = vld [vmem:[#allocation10 + $0x74] sm:$0xf]
    %v2216 = vld [vmem:[#allocation10 + $0x78] sm:$0xf]
    %v2217 = vld [vmem:[#allocation10 + $0x7c] sm:$0xf]
    %v2218 = vld [vmem:[%s6] sm:$0x1]
    %v2220 = vlaneseq
    %v2221 = vshrl.u32 %v2220, 7
    %v2222 = vsub.s32 0, %v2221
    %v2223 = vrot.slane %v2218, %v2222
    %v2257 = vunpack.c.l.b16 %v2186
    %v2258 = vunpack.c.l.b16 %v2187
    %v2259 = vunpack.c.l.b16 %v2188
    %v2260 = vunpack.c.l.b16 %v2189
    %v2261 = vunpack.c.l.b16 %v2190
    %v2262 = vunpack.c.l.b16 %v2191
    %v2263 = vunpack.c.l.b16 %v2192
    %v2264 = vunpack.c.l.b16 %v2193
    %v2265 = vunpack.c.l.b16 %v2194
    %v2266 = vunpack.c.l.b16 %v2195
    %v2267 = vunpack.c.l.b16 %v2196
    %v2268 = vunpack.c.l.b16 %v2197
    %v2269 = vunpack.c.l.b16 %v2198
    %v2270 = vunpack.c.l.b16 %v2199
    %v2271 = vunpack.c.l.b16 %v2200
    %v2272 = vunpack.c.l.b16 %v2201
    %v2273 = vunpack.c.l.b16 %v2202
    %v2274 = vunpack.c.l.b16 %v2203
    %v2275 = vunpack.c.l.b16 %v2204
    %v2276 = vunpack.c.l.b16 %v2205
    %v2277 = vunpack.c.l.b16 %v2206
    %v2278 = vunpack.c.l.b16 %v2207
    %v2279 = vunpack.c.l.b16 %v2208
    %v2280 = vunpack.c.l.b16 %v2209
    %v2281 = vunpack.c.l.b16 %v2210
    %v2282 = vunpack.c.l.b16 %v2211
    %v2283 = vunpack.c.l.b16 %v2212
    %v2284 = vunpack.c.l.b16 %v2213
    %v2285 = vunpack.c.l.b16 %v2214
    %v2286 = vunpack.c.l.b16 %v2215
    %v2287 = vunpack.c.l.b16 %v2216
    %v2288 = vunpack.c.l.b16 %v2217
    %v2289 = vpack.c.b16 %v2258, %v2257
    %v2290 = vpack.c.b16 %v2260, %v2259
    %v2291 = vpack.c.b16 %v2262, %v2261
    %v2292 = vpack.c.b16 %v2264, %v2263
    %v2293 = vpack.c.b16 %v2266, %v2265
    %v2294 = vpack.c.b16 %v2268, %v2267
    %v2295 = vpack.c.b16 %v2270, %v2269
    %v2296 = vpack.c.b16 %v2272, %v2271
    %v2297 = vpack.c.b16 %v2274, %v2273
    %v2298 = vpack.c.b16 %v2276, %v2275
    %v2299 = vpack.c.b16 %v2278, %v2277
    %v2300 = vpack.c.b16 %v2280, %v2279
    %v2301 = vpack.c.b16 %v2282, %v2281
    %v2302 = vpack.c.b16 %v2284, %v2283
    %v2303 = vpack.c.b16 %v2286, %v2285
    %v2304 = vpack.c.b16 %v2288, %v2287
    %2321 = vmatprep.subr.bf16.mxu0 0
    %2322 = vmatpush1.bf16.msra.mxu0 %v2296
    %2323 = vmatprep.subr.bf16.mxu0 0
    %2324 = vmatpush1.bf16.msra.mxu0 %v2295
    %2325 = vmatprep.subr.bf16.mxu0 0
    %2326 = vmatpush1.bf16.msra.mxu0 %v2294
    %2327 = vmatprep.subr.bf16.mxu0 0
    %2328 = vmatpush1.bf16.msra.mxu0 %v2293
    %2329 = vmatprep.subr.bf16.mxu0 0
    %2330 = vmatpush1.bf16.msra.mxu0 %v2292
    %2331 = vmatprep.subr.bf16.mxu0 0
    %2332 = vmatpush1.bf16.msra.mxu0 %v2291
    %2333 = vmatprep.subr.bf16.mxu0 0
    %2334 = vmatpush1.bf16.msra.mxu0 %v2290
    %2335 = vmatprep.subr.bf16.mxu0 0
    %2336 = vmatpush1.bf16.msra.mxu0 %v2289
    %2337 = vmatprep.subr.bf16.mxu0 0
    %2338 = vmatpush2.bf16.msra.mxu0 %v2304
    %2339 = vmatprep.subr.bf16.mxu0 0
    %2340 = vmatpush2.bf16.msra.mxu0 %v2303
    %2341 = vmatprep.subr.bf16.mxu0 0
    %2342 = vmatpush2.bf16.msra.mxu0 %v2302
    %2343 = vmatprep.subr.bf16.mxu0 0
    %2344 = vmatpush2.bf16.msra.mxu0 %v2301
    %2345 = vmatprep.subr.bf16.mxu0 0
    %2346 = vmatpush2.bf16.msra.mxu0 %v2300
    %2347 = vmatprep.subr.bf16.mxu0 0
    %2348 = vmatpush2.bf16.msra.mxu0 %v2299
    %2349 = vmatprep.subr.bf16.mxu0 0
    %2350 = vmatpush2.bf16.msra.mxu0 %v2298
    %2351 = vmatprep.subr.bf16.mxu0 0
    %2352 = vmatpush2.bf16.msra.mxu0 %v2297
    %2353 = vmatprep.mubr.bf16.mxu0 %v2185
    %2354 = vmatmul.mubr.bf16.gmra.mxu0 %v2184
    %v2355 = vpop.f32.mrf.mxu0
    %v2356 = vadd.f32 %v2223, %v2355
    %v2357 = vpop.f32.mrf.mxu0
    %v2358 = vpop.f32.mrf.mxu0
    %v2359 = vadd.f32 %v2223, %v2358
    %v2360 = vpop.f32.mrf.mxu0
    %2361 = vdwg.mxu0
    %2362 = vrot.lane.b32.xlu0 %v2356, 88
    %v2363 = vpop.permute.xlu0 %2362
    %2364 = vrot.lane.b32.xlu0 %v2359, 88
    %v2365 = vpop.permute.xlu0 %2364
    %v2366 = vmul.f32 %v2363, 0.5
    %v2367 = vmul.f32 %v2365, 0.5
    %v2368 = vmul.f32 %v2366, 1.442695
    %v2369 = vpow.pop %v2368
    %v2370 = vmul.f32 %v2367, 1.442695
    %v2371 = vpow.pop %v2370
    %v2372 = vlaneseq
    %v2373 = vand.u32 %v2372, 127
    %vm2374 = vcmp.lt.s32.totalorder %v2373, 40
    %v2375 = vld [vmem:[%s7] sm:$0xf]
    %v2376 = vld [vmem:[%s7 + $0x4] sm:$0xf]
    %v2377 = vunpack.c.l.bf16 %v2375
    %v2378 = vunpack.c.l.bf16 %v2376
    %v2379 = vmul.f32 %v2377, %v2369
    %v2380 = vmul.f32 %v2378, %v2371
    %v2381 = vsel %vm2374, %v2379, 0.0
    %v2382 = vsel %vm2374, %v2380, 0.0
    %v2383 = vadd.f32 %v2356, %v2381
    %v2384 = vadd.f32 %v2359, %v2382
    %2385 = vst [vmem:[#allocation11] sm:$0xff] %v2383
    %2386 = vst [vmem:[#allocation11 + $0x8] sm:$0xff] %v2384
    // Predicated region
    $region54: #{tpu_custom_call.1} parent=1 // pred_check
      _
    $region55: #{tpu_custom_call.1} parent=1 // pred_check_branch
      %2388 = sbr.rel (0) target = $region57
    $region56: #{tpu_custom_call.1} parent=1 // pred_region
      %s2390 = ssub.s32 256, 256
      %2391 = vsyncadd [#allocation4], %s2390
      %s2392 = sshll.u32 [#allocation11], 4
      %s2393 = int_to_ptr.vmem [resolvable:$true] %s2392
      %2398 = dma.vmem_to_hbm [thread:$0]  %s2393, 256, %s8, [#allocation4], 128, 128, 8
    $region57: #{tpu_custom_call.1} parent=1 // pred_fallthru
      _
    // Predicated region
    $region58: #{tpu_custom_call.1} parent=1 // pred_check
      _
    $region59: #{tpu_custom_call.1} parent=1 // pred_check_branch
      %2400 = sbr.rel (0) target = $region61
    $region60: #{tpu_custom_call.1} parent=1 // pred_region
      %2401 = dma.done [#allocation4], 256
    $region61: #{tpu_custom_call.1} parent=1 // pred_fallthru
      _
    %2402 = vsyncpa [#allocation3], 1
    %2403 = vsyncpa [#allocation6], 1
    %2404 = vsyncpa [#allocation9], 1
    %2405 = vsyncpa [#allocation4], 1

</llo_original>
